<compile_context>
chip_gen: v5e
topology: v5e:2x2
jax: 0.10.0
libtpu: 0.0.40
codegen_flags: <defaults>
</compile_context>

<pallas_src>
import functools

import jax
import jax.numpy as jnp
from jax.experimental import pallas as pl
from jax.experimental.pallas import tpu as pltpu


def _round_up(n: int, m: int) -> int:
    return ((n + m - 1) // m) * m


def residual_ffn_kernel(x_ref, alpha_ref, beta_ref,
                        w1_ref, b1_ref, w2_ref, b2_ref,
                        o_ref,
                        normed_ref, acc_ref,
                        *, d_model, eps):
    """Grid = (row tiles, d_ff chunks). One (tm, d_pad) row tile per i."""
    f = pl.program_id(1)
    nf = pl.num_programs(1)

    # ---- LayerNorm once per row tile (f == 0); cache bf16 normed, zero acc ----
    @pl.when(f == 0)
    def _():
        x = x_ref[...].astype(jnp.float32)                     # (tm, d_pad)
        d_pad = x.shape[-1]
        if d_pad == d_model:
            mean = jnp.mean(x, axis=-1, keepdims=True)
            diff = x - mean
        else:
            # Padded lanes of x are zero, so a plain sum is already correct.
            mean = jnp.sum(x, axis=-1, keepdims=True) * (1.0 / d_model)
            lane = jax.lax.broadcasted_iota(jnp.int32, x.shape, 1)
            diff = jnp.where(lane < d_model, x - mean, 0.0)    # mask var only
        var = jnp.sum(diff * diff, axis=-1, keepdims=True) * (1.0 / (d_model - 1))
        std = jnp.sqrt(var)                                    # unbiased, torch.std
        inv = pl.reciprocal(std + eps, approx=True)            # EUP slot (~free)
        normed = alpha_ref[0] * diff * inv + beta_ref[0]
        # Padded lanes of `normed` only ever hit zero-padded W1 rows -> no re-mask.
        normed_ref[...] = normed.astype(jnp.bfloat16)
        acc_ref[...] = jnp.zeros_like(acc_ref)

    # ---- sublayer FFN, d_ff-chunked: acc += relu(normed @ W1_f + b1_f) @ W2_f ----
    h = jnp.dot(normed_ref[...], w1_ref[...],
                preferred_element_type=jnp.float32) + b1_ref[...]
    h = jnp.maximum(h, 0.0)                                    # ReLU
    acc_ref[...] += jnp.dot(h.astype(jnp.bfloat16), w2_ref[...],
                            preferred_element_type=jnp.float32)

    # ---- finalize: bias + dropout (identity at inference) + residual add ----
    # TODO(synk): training-mode dropout would use pltpu.prng_seed / prng_random_bits.
    @pl.when(f == nf - 1)
    def _():
        out = x_ref[...].astype(jnp.float32) + acc_ref[...] + b2_ref[...]
        o_ref[...] = out.astype(o_ref.dtype)


def residual_connection_ffn(x, alpha, beta, w1_io, b1, w2_io, b2,
                            *, eps=1e-6, tm=None, tf=None):
    """out = x + Dropout(FFN(LayerNorm(x)))   (dropout = identity at inference)

    x     : (batch, seq, d_model)
    alpha : (1,) LayerNorm scale     beta : (1,) LayerNorm bias
    w1_io : (d_model, d_ff)  first Linear weight, stored (in, out)
    b1    : (d_ff,)
    w2_io : (d_ff, d_model)  second Linear weight, stored (in, out)
    b2    : (d_model,)
    """
    batch, seq, d_model = x.shape
    d_ff = w1_io.shape[1]
    assert w1_io.shape == (d_model, d_ff)
    assert w2_io.shape == (d_ff, d_model)

    M = batch * seq
    d_pad = _round_up(d_model, 128)          # lane-dense feature dims
    f_pad = _round_up(d_ff, 128)

    if tm is None:
        # 256-row tiles fill the v6e/v7x 256-wide MXU; keep >= 2 row tiles so the
        # parallel M axis can still be split across both TensorCores on v7x.
        tm = 256 if M >= 512 else 128
    m_pad = _round_up(M, tm)

    if tf is None:
        # d_ff chunk size: bounds per-step weight VMEM and pipelines weight DMA.
        tf = 512 if f_pad % 512 == 0 else (256 if f_pad % 256 == 0 else 128)
    nf = f_pad // tf

    x2d = jnp.pad(x.reshape(M, d_model),
                  ((0, m_pad - M), (0, d_pad - d_model)))
    # bf16 weights: MXU-native on v5e/v6e/v7x, halves weight VMEM/HBM traffic.
    w1_p = jnp.pad(w1_io, ((0, d_pad - d_model), (0, f_pad - d_ff))).astype(jnp.bfloat16)
    w2_p = jnp.pad(w2_io, ((0, f_pad - d_ff), (0, d_pad - d_model))).astype(jnp.bfloat16)
    b1_p = jnp.pad(b1.reshape(1, d_ff), ((0, 0), (0, f_pad - d_ff))).astype(jnp.float32)
    b2_p = jnp.pad(b2.reshape(1, d_model), ((0, 0), (0, d_pad - d_model))).astype(jnp.float32)
    alpha1 = alpha.reshape(1).astype(jnp.float32)    # SMEM scalar
    beta1 = beta.reshape(1).astype(jnp.float32)      # SMEM scalar

    grid = (m_pad // tm, nf)
    kernel = functools.partial(residual_ffn_kernel, d_model=d_model, eps=eps)

    flops = 4 * m_pad * d_pad * f_pad + 12 * m_pad * d_pad
    bytes_accessed = (2 * m_pad * d_pad * 4                       # x in + out
                      + (m_pad // tm) * (2 * d_pad * f_pad * 2)   # bf16 weights/row-tile
                      + (f_pad + d_pad) * 4)                      # biases

    out2d = pl.pallas_call(
        kernel,
        out_shape=jax.ShapeDtypeStruct((m_pad, d_pad), x.dtype),
        grid_spec=pltpu.PrefetchScalarGridSpec(
            num_scalar_prefetch=0,
            grid=grid,
            in_specs=[
                pl.BlockSpec((tm, d_pad), lambda i, f: (i, 0)),      # x row tile (resident over f)
                pl.BlockSpec(memory_space=pltpu.MemorySpace.SMEM),   # alpha (scalar)
                pl.BlockSpec(memory_space=pltpu.MemorySpace.SMEM),   # beta  (scalar)
                pl.BlockSpec((d_pad, tf), lambda i, f: (0, f)),      # W1 d_ff chunk (bf16)
                pl.BlockSpec((1, tf), lambda i, f: (0, f)),          # b1 chunk
                pl.BlockSpec((tf, d_pad), lambda i, f: (f, 0)),      # W2 d_ff chunk (bf16)
                pl.BlockSpec((1, d_pad), lambda i, f: (0, 0),
                             pipeline_mode=pl.Buffered(1)),          # b2 (constant -> single buffer)
            ],
            out_specs=pl.BlockSpec((tm, d_pad), lambda i, f: (i, 0)),
            scratch_shapes=[
                pltpu.VMEM((tm, d_pad), jnp.bfloat16),   # cached LayerNorm output
                pltpu.VMEM((tm, d_pad), jnp.float32),    # f32 FFN accumulator
            ],
        ),
        compiler_params=pltpu.CompilerParams(
            dimension_semantics=("parallel", "arbitrary"),
            vmem_limit_bytes=48 * 1024 * 1024,
        ),
        cost_estimate=pl.CostEstimate(
            flops=flops, transcendentals=2 * m_pad, bytes_accessed=bytes_accessed),
    )(x2d, alpha1, beta1, w1_p, b1_p, w2_p, b2_p)

    return out2d[:M, :d_model].reshape(batch, seq, d_model)


def reference(x, alpha, beta, w1_io, b1, w2_io, b2, eps=1e-6):
    mean = jnp.mean(x, axis=-1, keepdims=True)
    var = jnp.sum((x - mean) ** 2, axis=-1, keepdims=True) / (x.shape[-1] - 1)
    std = jnp.sqrt(var)                              # unbiased, like torch.std
    normed = alpha * (x - mean) / (std + eps) + beta
    h = jnp.maximum(jnp.einsum("bsd,df->bsf", normed, w1_io) + b1, 0.0)
    y = jnp.einsum("bsf,fd->bsd", h, w2_io) + b2     # dropout = identity
    return x + y


if __name__ == "__main__":
    batch, seq, d_model, d_ff = 2, 128, 128, 256
    key = jax.random.PRNGKey(0)
    kx, k1, k2, k3, k4 = jax.random.split(key, 5)

    x = jax.random.normal(kx, (batch, seq, d_model), dtype=jnp.float32)

    # nn.Linear weights are (out, in); pre-transpose ONCE at parameter-load time
    # to (in, out) so no per-call transpose copy is made.
    w1 = jax.random.normal(k1, (d_ff, d_model), dtype=jnp.float32) * (d_model ** -0.5)
    b1 = jax.random.normal(k2, (d_ff,), dtype=jnp.float32) * 0.01
    w2 = jax.random.normal(k3, (d_model, d_ff), dtype=jnp.float32) * (d_ff ** -0.5)
    b2 = jax.random.normal(k4, (d_model,), dtype=jnp.float32) * 0.01
    w1_io = w1.T    # (d_model, d_ff)
    w2_io = w2.T    # (d_ff, d_model)

    # LayerNormalization scalar parameters (torch init: ones(1)/zeros(1); use
    # slightly perturbed deterministic values so the plumbing is actually tested).
    alpha = jnp.full((1,), 1.1, dtype=jnp.float32)
    beta = jnp.full((1,), 0.05, dtype=jnp.float32)

    out = residual_connection_ffn(x, alpha, beta, w1_io, b1, w2_io, b2)
    jax.block_until_ready(out)

    ref = reference(x, alpha, beta, w1_io, b1, w2_io, b2)
    assert out.shape == (batch, seq, d_model)
    # bf16 matmuls (f32 accumulation) + approx reciprocal => ~1e-2-level deltas
    # vs the pure-f32 reference are expected.
    err = float(jnp.max(jnp.abs(out - ref)))
    assert jnp.allclose(out, ref, atol=1e-1, rtol=2e-2), err
    print("KERNEL_OK")
</pallas_src>

<mosaic_0001>
module attributes {stable_mosaic.version = 11 : i64} {
  func.func @residual_ffn_kernel(%arg0: i32, %arg1: i32, %arg2: memref<128x128xf32, #tpu.memory_space<vmem>>, %arg3: memref<1xf32, #tpu.memory_space<smem>>, %arg4: memref<1xf32, #tpu.memory_space<smem>>, %arg5: memref<128x256xbf16, #tpu.memory_space<vmem>>, %arg6: memref<1x256xf32, #tpu.memory_space<vmem>>, %arg7: memref<256x128xbf16, #tpu.memory_space<vmem>>, %arg8: memref<1x128xf32, #tpu.memory_space<vmem>>, %arg9: memref<128x128xf32, #tpu.memory_space<vmem>>, %arg10: memref<128x128xbf16, #tpu.memory_space<vmem>>, %arg11: memref<128x128xf32, #tpu.memory_space<vmem>>) attributes {dimension_semantics = [#tpu.dimension_semantics<parallel>, #tpu.dimension_semantics<arbitrary>], iteration_bounds = array<i64: 2, 1>, scalar_prefetch = 0 : i64, scratch_operands = 2 : i64, tpu.core_type = #tpu.core_type<tc>, window_params = [{transform_indices = @transform_0, window_bounds = array<i64: 128, 128>}, {transform_indices = @transform_1, window_bounds = array<i64: 1>}, {transform_indices = @transform_2, window_bounds = array<i64: 1>}, {transform_indices = @transform_3, window_bounds = array<i64: 128, 256>}, {transform_indices = @transform_4, window_bounds = array<i64: 1, 256>}, {transform_indices = @transform_5, window_bounds = array<i64: 256, 128>}, {pipeline_mode = #tpu.pipeline_mode<synchronous>, transform_indices = @transform_6, window_bounds = array<i64: 1, 128>}, {transform_indices = @transform_7, window_bounds = array<i64: 128, 128>}]} {
    %c0_i32 = arith.constant 0 : i32
    %0 = arith.cmpi eq, %arg1, %c0_i32 : i32
    %1 = arith.extui %0 : i1 to i32
    %c0_i32_0 = arith.constant 0 : i32
    %2 = arith.cmpi ne, %1, %c0_i32_0 : i32
    scf.if %2 {
      %c0_16 = arith.constant 0 : index
      %c0_17 = arith.constant 0 : index
      %20 = vector.load %arg2[%c0_16, %c0_17] : memref<128x128xf32, #tpu.memory_space<vmem>>, vector<128x128xf32>
      %cst_18 = arith.constant dense<0.000000e+00> : vector<128xf32>
      %21 = vector.multi_reduction <add>, %20, %cst_18 [1] : vector<128x128xf32> to vector<128xf32>
      %22 = vector.shape_cast %21 : vector<128xf32> to vector<128x1xf32>
      %cst_19 = arith.constant 1.280000e+02 : f32
      %23 = vector.broadcast %cst_19 : f32 to vector<128x1xf32>
      %24 = arith.divf %22, %23 : vector<128x1xf32>
      %25 = vector.broadcast %24 : vector<128x1xf32> to vector<128x128xf32>
      %26 = arith.subf %20, %25 : vector<128x128xf32>
      %27 = arith.mulf %26, %26 : vector<128x128xf32>
      %cst_20 = arith.constant dense<0.000000e+00> : vector<128xf32>
      %28 = vector.multi_reduction <add>, %27, %cst_20 [1] : vector<128x128xf32> to vector<128xf32>
      %29 = vector.shape_cast %28 : vector<128xf32> to vector<128x1xf32>
      %cst_21 = arith.constant 0.00787401571 : f32
      %30 = vector.broadcast %cst_21 : f32 to vector<128x1xf32>
      %31 = arith.mulf %29, %30 : vector<128x1xf32>
      %32 = math.sqrt %31 : vector<128x1xf32>
      %cst_22 = arith.constant 9.99999997E-7 : f32
      %33 = vector.broadcast %cst_22 : f32 to vector<128x1xf32>
      %34 = arith.addf %32, %33 : vector<128x1xf32>
      %35 = tpu.reciprocal %34 {approx = true} : vector<128x1xf32> -> vector<128x1xf32>
      %c0_23 = arith.constant 0 : index
      %36 = memref.load %arg3[%c0_23] : memref<1xf32, #tpu.memory_space<smem>>
      %37 = vector.broadcast %36 : f32 to vector<128x128xf32>
      %38 = arith.mulf %37, %26 : vector<128x128xf32>
      %39 = vector.broadcast %35 : vector<128x1xf32> to vector<128x128xf32>
      %40 = arith.mulf %38, %39 : vector<128x128xf32>
      %c0_24 = arith.constant 0 : index
      %41 = memref.load %arg4[%c0_24] : memref<1xf32, #tpu.memory_space<smem>>
      %42 = vector.broadcast %41 : f32 to vector<128x128xf32>
      %43 = arith.addf %40, %42 : vector<128x128xf32>
      %44 = arith.truncf %43 : vector<128x128xf32> to vector<128x128xbf16>
      %c0_25 = arith.constant 0 : index
      %c0_26 = arith.constant 0 : index
      %45 = vector.load %arg10[%c0_25, %c0_26] : memref<128x128xbf16, #tpu.memory_space<vmem>>, vector<128x128xbf16>
      tpu.vector_store %arg10[%c0_25, %c0_26], %44 {strides = array<i32>} : memref<128x128xbf16, #tpu.memory_space<vmem>>, vector<128x128xbf16>,
      %cst_27 = arith.constant 0.000000e+00 : f32
      %46 = vector.broadcast %cst_27 : f32 to vector<128x128xf32>
      %c0_28 = arith.constant 0 : index
      %c0_29 = arith.constant 0 : index
      %47 = vector.load %arg11[%c0_28, %c0_29] : memref<128x128xf32, #tpu.memory_space<vmem>>, vector<128x128xf32>
      tpu.vector_store %arg11[%c0_28, %c0_29], %46 {strides = array<i32>} : memref<128x128xf32, #tpu.memory_space<vmem>>, vector<128x128xf32>,
    } else {
    }
    %c0 = arith.constant 0 : index
    %c0_1 = arith.constant 0 : index
    %3 = vector.load %arg10[%c0, %c0_1] : memref<128x128xbf16, #tpu.memory_space<vmem>>, vector<128x128xbf16>
    %c0_2 = arith.constant 0 : index
    %c0_3 = arith.constant 0 : index
    %4 = vector.load %arg5[%c0_2, %c0_3] : memref<128x256xbf16, #tpu.memory_space<vmem>>, vector<128x256xbf16>
    %cst = arith.constant dense<0.000000e+00> : vector<128x256xf32>
    %5 = tpu.matmul %3, %4, %cst {dimension_numbers = #tpu.dot_dimension_numbers<[1], [0], [0], [1], [0, 0, 1, 1], [], []>} : vector<128x128xbf16>, vector<128x256xbf16>, vector<128x256xf32> -> vector<128x256xf32>
    %c0_4 = arith.constant 0 : index
    %c0_5 = arith.constant 0 : index
    %6 = vector.load %arg6[%c0_4, %c0_5] : memref<1x256xf32, #tpu.memory_space<vmem>>, vector<1x256xf32>
    %7 = vector.broadcast %6 : vector<1x256xf32> to vector<128x256xf32>
    %8 = arith.addf %5, %7 : vector<128x256xf32>
    %cst_6 = arith.constant 0.000000e+00 : f32
    %9 = vector.broadcast %cst_6 : f32 to vector<128x256xf32>
    %10 = arith.maximumf %8, %9 : vector<128x256xf32>
    %c0_7 = arith.constant 0 : index
    %c0_8 = arith.constant 0 : index
    %11 = vector.load %arg11[%c0_7, %c0_8] : memref<128x128xf32, #tpu.memory_space<vmem>>, vector<128x128xf32>
    %12 = arith.truncf %10 : vector<128x256xf32> to vector<128x256xbf16>
    %c0_9 = arith.constant 0 : index
    %c0_10 = arith.constant 0 : index
    %13 = vector.load %arg7[%c0_9, %c0_10] : memref<256x128xbf16, #tpu.memory_space<vmem>>, vector<256x128xbf16>
    %cst_11 = arith.constant dense<0.000000e+00> : vector<128x128xf32>
    %14 = tpu.matmul %12, %13, %cst_11 {dimension_numbers = #tpu.dot_dimension_numbers<[1], [0], [0], [1], [0, 0, 1, 1], [], []>} : vector<128x256xbf16>, vector<256x128xbf16>, vector<128x128xf32> -> vector<128x128xf32>
    %15 = arith.addf %11, %14 : vector<128x128xf32>
    %c0_12 = arith.constant 0 : index
    %c0_13 = arith.constant 0 : index
    %16 = vector.load %arg11[%c0_12, %c0_13] : memref<128x128xf32, #tpu.memory_space<vmem>>, vector<128x128xf32>
    tpu.vector_store %arg11[%c0_12, %c0_13], %15 {strides = array<i32>} : memref<128x128xf32, #tpu.memory_space<vmem>>, vector<128x128xf32>,
    %c0_i32_14 = arith.constant 0 : i32
    %17 = arith.cmpi eq, %arg1, %c0_i32_14 : i32
    %18 = arith.extui %17 : i1 to i32
    %c0_i32_15 = arith.constant 0 : i32
    %19 = arith.cmpi ne, %18, %c0_i32_15 : i32
    scf.if %19 {
      %c0_16 = arith.constant 0 : index
      %c0_17 = arith.constant 0 : index
      %20 = vector.load %arg2[%c0_16, %c0_17] : memref<128x128xf32, #tpu.memory_space<vmem>>, vector<128x128xf32>
      %c0_18 = arith.constant 0 : index
      %c0_19 = arith.constant 0 : index
      %21 = vector.load %arg11[%c0_18, %c0_19] : memref<128x128xf32, #tpu.memory_space<vmem>>, vector<128x128xf32>
      %22 = arith.addf %20, %21 : vector<128x128xf32>
      %c0_20 = arith.constant 0 : index
      %c0_21 = arith.constant 0 : index
      %23 = vector.load %arg8[%c0_20, %c0_21] : memref<1x128xf32, #tpu.memory_space<vmem>>, vector<1x128xf32>
      %24 = vector.broadcast %23 : vector<1x128xf32> to vector<128x128xf32>
      %25 = arith.addf %22, %24 : vector<128x128xf32>
      %c0_22 = arith.constant 0 : index
      %c0_23 = arith.constant 0 : index
      %26 = vector.load %arg9[%c0_22, %c0_23] : memref<128x128xf32, #tpu.memory_space<vmem>>, vector<128x128xf32>
      tpu.vector_store %arg9[%c0_22, %c0_23], %25 {strides = array<i32>} : memref<128x128xf32, #tpu.memory_space<vmem>>, vector<128x128xf32>,
    } else {
    }
    return
  }
  func.func @transform_0(%arg0: i32, %arg1: i32) -> (i32, i32) {
    %c0_i32 = arith.constant 0 : i32
    %c0_i32_0 = arith.constant 0 : i32
    return %arg0, %c0_i32 : i32, i32
  }
  func.func @transform_1(%arg0: i32, %arg1: i32) -> i32 {
    %c0_i32 = arith.constant 0 : i32
    %c0_i32_0 = arith.constant 0 : i32
    return %c0_i32 : i32
  }
  func.func @transform_2(%arg0: i32, %arg1: i32) -> i32 {
    %c0_i32 = arith.constant 0 : i32
    %c0_i32_0 = arith.constant 0 : i32
    return %c0_i32 : i32
  }
  func.func @transform_3(%arg0: i32, %arg1: i32) -> (i32, i32) {
    %c0_i32 = arith.constant 0 : i32
    %c0_i32_0 = arith.constant 0 : i32
    return %c0_i32, %arg1 : i32, i32
  }
  func.func @transform_4(%arg0: i32, %arg1: i32) -> (i32, i32) {
    %c0_i32 = arith.constant 0 : i32
    %c0_i32_0 = arith.constant 0 : i32
    return %c0_i32, %arg1 : i32, i32
  }
  func.func @transform_5(%arg0: i32, %arg1: i32) -> (i32, i32) {
    %c0_i32 = arith.constant 0 : i32
    %c0_i32_0 = arith.constant 0 : i32
    return %arg1, %c0_i32 : i32, i32
  }
  func.func @transform_6(%arg0: i32, %arg1: i32) -> (i32, i32) {
    %c0_i32 = arith.constant 0 : i32
    %c0_i32_0 = arith.constant 0 : i32
    %c0_i32_1 = arith.constant 0 : i32
    return %c0_i32, %c0_i32_0 : i32, i32
  }
  func.func @transform_7(%arg0: i32, %arg1: i32) -> (i32, i32) {
    %c0_i32 = arith.constant 0 : i32
    %c0_i32_0 = arith.constant 0 : i32
    return %arg0, %c0_i32 : i32, i32
  }
}

</mosaic_0001>

<llo_original>
// kernel: tpu_custom_call.1
$region0: #{tpu_custom_call.1}
  #allocation0 [shape = 'u32[]', space=smem, size = 0x4, offset = 0x4, fixed_abs, tag = 'smem constant byte address 0x4 - core index']
  #allocation1 [shape = 'u32[72,128]{1,0:T(1,128)}', space=vmem, size = 0x9000, scoped, tag = 'internal scratch']
  #allocation2 [shape = 'bf16[128,128]{1,0:T(8,128)(2,1)}', space=vmem, size = 0x8000, scoped, tag = 'scratch operand']
  #allocation3 [shape = 'f32[128,128]{1,0:T(8,128)}', space=vmem, size = 0x10000, scoped, tag = 'scratch operand']
  #allocation4 [shape = 'f32[1]{0:T(128)S(6)}', space=smem, size = 0x200, scoped, tag = 'scoped memory for tpu_custom_call.1']
  #allocation5 [shape = 'f32[1]{0:T(128)S(6)}', space=smem, size = 0x200, scoped, tag = 'scoped memory for tpu_custom_call.1']
  %s0 = inlined_call_operand.hbm [shape: f32[256,128], index: 0, kind: input, shape index: {}]
  %s1 = inlined_call_operand.<no memory space> [shape: f32[1], index: 1, kind: input, shape index: {}]
  %s2 = inlined_call_operand.<no memory space> [shape: f32[1], index: 2, kind: input, shape index: {}]
  %s3 = inlined_call_operand.hbm [shape: bf16[128,256], index: 3, kind: input, shape index: {}]
  %s4 = inlined_call_operand.vmem [shape: f32[1,256], index: 4, kind: input, shape index: {}]
  %s5 = inlined_call_operand.hbm [shape: bf16[256,128], index: 5, kind: input, shape index: {}]
  %s6 = inlined_call_operand.vmem [shape: f32[1,128], index: 6, kind: input, shape index: {}]
  %s7 = inlined_call_operand.hbm [shape: f32[256,128], index: 7, kind: output, shape index: {}]
  %s8 = sld [smem:[#allocation0]]
  $region81: #{tpu_custom_call.1} parent=0
    _
  %s10 = ssub.s32 1, %s8
  %s11 = scalar_select 0, %s10, %s8
  %12 = sst [smem:[#allocation4]] %s1
  %13 = sst [smem:[#allocation5]] %s2
  $region1: #{tpu_custom_call.1} parent=0
    #allocation6 [shape = 'u8[131072]{0}', space=vmem, size = 0x20000, scoped, tag = 'input window, operand 0']
    #allocation7 [shape = 's32[2]{0}', space=sflag, size = 0x8, scoped, tag = 'scoped memory for tpu_custom_call.1']
    #allocation8 [shape = 's32[2]{0}', space=sflag, size = 0x8, scoped, tag = 'scoped memory for tpu_custom_call.1']
    #allocation9 [shape = 'u8[65536]{0}', space=vmem, size = 0x10000, scoped, tag = 'input window, operand 3, single buffered']
    #allocation10 [shape = 's32[1]{0}', space=sflag, size = 0x4, scoped, tag = 'scoped memory for tpu_custom_call.1']
    #allocation11 [shape = 'u8[65536]{0}', space=vmem, size = 0x10000, scoped, tag = 'input window, operand 5, single buffered']
    #allocation12 [shape = 'u8[131072]{0}', space=vmem, size = 0x20000, scoped, tag = 'output window, operand 0']
    %14 = vsyncpa [#allocation7], 0
    %s15 = scalar_lea.sflag [#allocation7], 1
    %16 = vsyncpa %s15, 0
    %17 = vsyncpa [#allocation10], 0
    %18 = vsyncpa [#allocation8], 0
    %s19 = scalar_lea.sflag [#allocation8], 1
    %20 = vsyncpa %s19, 0
    loop: start=0, step=1, limit=4
    $region2: #{tpu_custom_call.1} parent=1 // loop_pre_header
      _
    $region3: #{tpu_custom_call.1} parent=1 // loop_header
      %s22 = sphi 0, %s26
      %p23 = scmp.ge.s32.totalorder %s22, 4
      %s29 = sphi 0, %s41
      %s30 = sphi 0, %s37
      %s31 = sphi 0, %s29
      %s32 = sphi 0, %s30
      %s33 = sphi 0, %s31
      %s34 = sphi 0, %s32
      %s44 = sphi 0, %s46
      %s47 = sphi 0, %s44
      %s48 = sphi 0, %s47
      %s64 = sphi 0, %s48
      %s68 = sphi 0, %s68
      %s70 = sphi 0, %s68
      %s71 = sphi 0, %s70
      %s85 = sphi 0, %s71
      %s89 = sphi 0, %s89
      %s91 = sphi 0, %s89
      %s92 = sphi 0, %s91
      %s106 = sphi 0, %s92
      %s112 = sphi 0, %s114
      %s115 = sphi 0, %s112
      %s116 = sphi 0, %s115
      %s132 = sphi 0, %s116
      %s138 = sphi 0, %s140
      %s141 = sphi 0, %s138
      %s142 = sphi 0, %s141
      %s158 = sphi 0, %s142
      %s164 = sphi 0, %s166
      %s167 = sphi 0, %s164
      %s168 = sphi 0, %s167
      %s184 = sphi 0, %s168
      %s188 = sphi 0, %s188
      %s190 = sphi 0, %s188
      %s191 = sphi 0, %s190
      %s205 = sphi 0, %s191
      %s211 = sphi 0, %s213
      %s214 = sphi 0, %s211
      %s215 = sphi 0, %s214
      %s231 = sphi 0, %s215
    $region4: #{tpu_custom_call.1} parent=1 // loop_header_branch
      %25 = sbr.rel (%p23) target = $region8
    $region5: #{tpu_custom_call.1} parent=1 // loop_body
      %s27 = ssub.s32 %s22, 1
      %s28 = ssub.s32 %s22, 2
      %s35 = sadd.s32 1, %s30
      %p36 = scmp.ge.s32.totalorder %s35, 1
      %s37 = scalar_select %p36, 0, %s35
      %s38 = sadd.s32 1, %s29
      %s39 = scalar_select %p36, %s38, %s29
      %p40 = scmp.ge.s32.totalorder %s39, 2
      %s41 = scalar_select %p40, 0, %s39
      %s42 = ssub.s32 %s29, %s41
      %p43 = scmp.eq.s32.totalorder %s42, 0
      %s45 = sadd.s32 %s44, 1
      %s46 = scalar_select %p43, %s44, %s45
      %p49 = pneg %p43
      %p50 = scmp.eq.s32.totalorder %s22, 1
      %p51 = por %p49, %p50
      %p52 = scmp.ne.s32.totalorder %s44, %s47
      %p53 = scmp.eq.s32.totalorder %s22, 0
      %p54 = por %p52, %p53
      %p55 = scmp.ne.s32.totalorder %s44, %s47
      %p56 = scmp.eq.s32.totalorder %s27, 1
      %p57 = por %p55, %p56
      %p58 = scmp.ne.s32.totalorder %s47, %s48
      %p59 = scmp.eq.s32.totalorder %s27, 0
      %p60 = por %p58, %p59
      %p61 = scmp.ne.s32.totalorder %s47, %s48
      %p62 = scmp.eq.s32.totalorder %s28, 1
      %p63 = por %p61, %p62
      %p65 = scmp.ne.s32.totalorder %s48, %s64
      %p66 = scmp.eq.s32.totalorder %s28, 0
      %p67 = por %p65, %p66
      %s69 = sadd.s32 %s68, 1
      %p72 = scmp.eq.s32.totalorder %s22, 1
      %p73 = scmp.ne.s32.totalorder %s68, %s70
      %p74 = scmp.eq.s32.totalorder %s22, 0
      %p75 = por %p73, %p74
      %p76 = scmp.ne.s32.totalorder %s68, %s70
      %p77 = scmp.eq.s32.totalorder %s27, 1
      %p78 = por %p76, %p77
      %p79 = scmp.ne.s32.totalorder %s70, %s71
      %p80 = scmp.eq.s32.totalorder %s27, 0
      %p81 = por %p79, %p80
      %p82 = scmp.ne.s32.totalorder %s70, %s71
      %p83 = scmp.eq.s32.totalorder %s28, 1
      %p84 = por %p82, %p83
      %p86 = scmp.ne.s32.totalorder %s71, %s85
      %p87 = scmp.eq.s32.totalorder %s28, 0
      %p88 = por %p86, %p87
      %s90 = sadd.s32 %s89, 1
      %p93 = scmp.eq.s32.totalorder %s22, 1
      %p94 = scmp.ne.s32.totalorder %s89, %s91
      %p95 = scmp.eq.s32.totalorder %s22, 0
      %p96 = por %p94, %p95
      %p97 = scmp.ne.s32.totalorder %s89, %s91
      %p98 = scmp.eq.s32.totalorder %s27, 1
      %p99 = por %p97, %p98
      %p100 = scmp.ne.s32.totalorder %s91, %s92
      %p101 = scmp.eq.s32.totalorder %s27, 0
      %p102 = por %p100, %p101
      %p103 = scmp.ne.s32.totalorder %s91, %s92
      %p104 = scmp.eq.s32.totalorder %s28, 1
      %p105 = por %p103, %p104
      %p107 = scmp.ne.s32.totalorder %s92, %s106
      %p108 = scmp.eq.s32.totalorder %s28, 0
      %p109 = por %p107, %p108
      %s110 = ssub.s32 %s30, %s37
      %p111 = scmp.eq.s32.totalorder %s110, 0
      %s113 = sadd.s32 %s112, 1
      %s114 = scalar_select %p111, %s112, %s113
      %p117 = pneg %p111
      %p118 = scmp.eq.s32.totalorder %s22, 1
      %p119 = por %p117, %p118
      %p120 = scmp.ne.s32.totalorder %s112, %s115
      %p121 = scmp.eq.s32.totalorder %s22, 0
      %p122 = por %p120, %p121
      %p123 = scmp.ne.s32.totalorder %s112, %s115
      %p124 = scmp.eq.s32.totalorder %s27, 1
      %p125 = por %p123, %p124
      %p126 = scmp.ne.s32.totalorder %s115, %s116
      %p127 = scmp.eq.s32.totalorder %s27, 0
      %p128 = por %p126, %p127
      %p129 = scmp.ne.s32.totalorder %s115, %s116
      %p130 = scmp.eq.s32.totalorder %s28, 1
      %p131 = por %p129, %p130
      %p133 = scmp.ne.s32.totalorder %s116, %s132
      %p134 = scmp.eq.s32.totalorder %s28, 0
      %p135 = por %p133, %p134
      %s136 = ssub.s32 %s30, %s37
      %p137 = scmp.eq.s32.totalorder %s136, 0
      %s139 = sadd.s32 %s138, 1
      %s140 = scalar_select %p137, %s138, %s139
      %p143 = pneg %p137
      %p144 = scmp.eq.s32.totalorder %s22, 1
      %p145 = por %p143, %p144
      %p146 = scmp.ne.s32.totalorder %s138, %s141
      %p147 = scmp.eq.s32.totalorder %s22, 0
      %p148 = por %p146, %p147
      %p149 = scmp.ne.s32.totalorder %s138, %s141
      %p150 = scmp.eq.s32.totalorder %s27, 1
      %p151 = por %p149, %p150
      %p152 = scmp.ne.s32.totalorder %s141, %s142
      %p153 = scmp.eq.s32.totalorder %s27, 0
      %p154 = por %p152, %p153
      %p155 = scmp.ne.s32.totalorder %s141, %s142
      %p156 = scmp.eq.s32.totalorder %s28, 1
      %p157 = por %p155, %p156
      %p159 = scmp.ne.s32.totalorder %s142, %s158
      %p160 = scmp.eq.s32.totalorder %s28, 0
      %p161 = por %p159, %p160
      %s162 = ssub.s32 %s30, %s37
      %p163 = scmp.eq.s32.totalorder %s162, 0
      %s165 = sadd.s32 %s164, 1
      %s166 = scalar_select %p163, %s164, %s165
      %p169 = pneg %p163
      %p170 = scmp.eq.s32.totalorder %s22, 1
      %p171 = por %p169, %p170
      %p172 = scmp.ne.s32.totalorder %s164, %s167
      %p173 = scmp.eq.s32.totalorder %s22, 0
      %p174 = por %p172, %p173
      %p175 = scmp.ne.s32.totalorder %s164, %s167
      %p176 = scmp.eq.s32.totalorder %s27, 1
      %p177 = por %p175, %p176
      %p178 = scmp.ne.s32.totalorder %s167, %s168
      %p179 = scmp.eq.s32.totalorder %s27, 0
      %p180 = por %p178, %p179
      %p181 = scmp.ne.s32.totalorder %s167, %s168
      %p182 = scmp.eq.s32.totalorder %s28, 1
      %p183 = por %p181, %p182
      %p185 = scmp.ne.s32.totalorder %s168, %s184
      %p186 = scmp.eq.s32.totalorder %s28, 0
      %p187 = por %p185, %p186
      %s189 = sadd.s32 %s188, 1
      %p192 = scmp.eq.s32.totalorder %s22, 1
      %p193 = scmp.ne.s32.totalorder %s188, %s190
      %p194 = scmp.eq.s32.totalorder %s22, 0
      %p195 = por %p193, %p194
      %p196 = scmp.ne.s32.totalorder %s188, %s190
      %p197 = scmp.eq.s32.totalorder %s27, 1
      %p198 = por %p196, %p197
      %p199 = scmp.ne.s32.totalorder %s190, %s191
      %p200 = scmp.eq.s32.totalorder %s27, 0
      %p201 = por %p199, %p200
      %p202 = scmp.ne.s32.totalorder %s190, %s191
      %p203 = scmp.eq.s32.totalorder %s28, 1
      %p204 = por %p202, %p203
      %p206 = scmp.ne.s32.totalorder %s191, %s205
      %p207 = scmp.eq.s32.totalorder %s28, 0
      %p208 = por %p206, %p207
      %s209 = ssub.s32 %s29, %s41
      %p210 = scmp.eq.s32.totalorder %s209, 0
      %s212 = sadd.s32 %s211, 1
      %s213 = scalar_select %p210, %s211, %s212
      %p216 = pneg %p210
      %p217 = scmp.eq.s32.totalorder %s22, 1
      %p218 = por %p216, %p217
      %p219 = scmp.ne.s32.totalorder %s211, %s214
      %p220 = scmp.eq.s32.totalorder %s22, 0
      %p221 = por %p219, %p220
      %p222 = scmp.ne.s32.totalorder %s211, %s214
      %p223 = scmp.eq.s32.totalorder %s27, 1
      %p224 = por %p222, %p223
      %p225 = scmp.ne.s32.totalorder %s214, %s215
      %p226 = scmp.eq.s32.totalorder %s27, 0
      %p227 = por %p225, %p226
      %p228 = scmp.ne.s32.totalorder %s214, %s215
      %p229 = scmp.eq.s32.totalorder %s28, 1
      %p230 = por %p228, %p229
      %p232 = scmp.ne.s32.totalorder %s215, %s231
      %p233 = scmp.eq.s32.totalorder %s28, 0
      %p234 = por %p232, %p233
      %p235 = scmp.le.s32.totalorder 1, %s22
      %p236 = scmp.lt.s32.totalorder %s22, 3
      %p237 = pnand %p235, %p236
      %p238 = pneg %p237
      // Predicated region
      $region9: #{tpu_custom_call.1} parent=5 // pred_check
        _
      $region10: #{tpu_custom_call.1} parent=5 // pred_check_branch
        %240 = sbr.rel (%p237) target = $region12
      $region11: #{tpu_custom_call.1} parent=5 // pred_region
        %s241 = ssub.s32 %s22, 1
        // Predicated region
        $region13: #{tpu_custom_call.1} parent=11 // pred_check
          %p242 = pneg %p81
        $region14: #{tpu_custom_call.1} parent=11 // pred_check_branch
          %244 = sbr.rel (%p242) target = $region16
        $region15: #{tpu_custom_call.1} parent=11 // pred_region
          _
        $region16: #{tpu_custom_call.1} parent=11 // pred_fallthru
          _
        // Predicated region
        $region17: #{tpu_custom_call.1} parent=11 // pred_check
          %p245 = pneg %p102
        $region18: #{tpu_custom_call.1} parent=11 // pred_check_branch
          %247 = sbr.rel (%p245) target = $region20
        $region19: #{tpu_custom_call.1} parent=11 // pred_region
          _
        $region20: #{tpu_custom_call.1} parent=11 // pred_fallthru
          _
        // Predicated region
        $region21: #{tpu_custom_call.1} parent=11 // pred_check
          %p248 = pneg %p128
        $region22: #{tpu_custom_call.1} parent=11 // pred_check_branch
          %250 = sbr.rel (%p248) target = $region24
        $region23: #{tpu_custom_call.1} parent=11 // pred_region
          %s251 = smul.u32 2, %s32
          %253 = vsyncadd [#allocation10], 0
          %s254 = smul.addr %s251, 4
          %s255 = scalar_lea.hbm %s3, %s254
          %s256 = sshll.u32 %s255, 4
          %s257 = int_to_ptr.hbm [resolvable:$true] %s256
          %s258 = sshll.u32 [#allocation9], 4
          %s259 = int_to_ptr.vmem [resolvable:$true] %s258
          %264 = dma.hbm_to_vmem [thread:$0]  %s257, 2048, %s259, [#allocation10], 128, 128, 8
        $region24: #{tpu_custom_call.1} parent=11 // pred_fallthru
          _
        // Predicated region
        $region25: #{tpu_custom_call.1} parent=11 // pred_check
          %p265 = pneg %p154
        $region26: #{tpu_custom_call.1} parent=11 // pred_check_branch
          %267 = sbr.rel (%p265) target = $region28
        $region27: #{tpu_custom_call.1} parent=11 // pred_region
          %s268 = smul.u32 2, %s32
          %p269 = scmp.lt.s32.totalorder %s268, 1
          %s270 = scalar_select %p269, %s268, 1
          %s271 = scalar_lea.vmem %s4, %s270
          %s272 = smul.u32 2, %s32
        $region28: #{tpu_custom_call.1} parent=11 // pred_fallthru
          _
        // Predicated region
        $region29: #{tpu_custom_call.1} parent=11 // pred_check
          %p273 = pneg %p180
        $region30: #{tpu_custom_call.1} parent=11 // pred_check_branch
          %275 = sbr.rel (%p273) target = $region32
        $region31: #{tpu_custom_call.1} parent=11 // pred_region
          %s276 = smul.u32 32, %s32
          %278 = vsyncadd [#allocation10], 0
          %s279 = smul.addr %s276, 4
          %s280 = scalar_lea.hbm %s5, %s279
          %s281 = sshll.u32 %s280, 4
          %s282 = int_to_ptr.hbm [resolvable:$true] %s281
          %s283 = sshll.u32 [#allocation11], 4
          %s284 = int_to_ptr.vmem [resolvable:$true] %s283
          %289 = dma.hbm_to_vmem [thread:$0]  %s282, 2048, %s284, [#allocation10], 64, 64, 4
        $region32: #{tpu_custom_call.1} parent=11 // pred_fallthru
          _
        // Predicated region
        $region33: #{tpu_custom_call.1} parent=11 // pred_check
          %p290 = pneg %p201
        $region34: #{tpu_custom_call.1} parent=11 // pred_check_branch
          %292 = sbr.rel (%p290) target = $region36
        $region35: #{tpu_custom_call.1} parent=11 // pred_region
          _
        $region36: #{tpu_custom_call.1} parent=11 // pred_fallthru
          _
      $region12: #{tpu_custom_call.1} parent=5 // pred_fallthru
        _
      %p293 = scmp.lt.s32.totalorder %s22, 2
      // Predicated region
      $region37: #{tpu_custom_call.1} parent=5 // pred_check
        %p294 = pneg %p293
      $region38: #{tpu_custom_call.1} parent=5 // pred_check_branch
        %296 = sbr.rel (%p294) target = $region40
      $region39: #{tpu_custom_call.1} parent=5 // pred_region
        // Predicated region
        $region41: #{tpu_custom_call.1} parent=39 // pred_check
          %p297 = pneg %p54
        $region42: #{tpu_custom_call.1} parent=39 // pred_check_branch
          %299 = sbr.rel (%p297) target = $region44
        $region43: #{tpu_custom_call.1} parent=39 // pred_region
          %s300 = sand.u32 %s44, 1
          %s301 = scalar_lea.sflag [#allocation7], %s300
          %s302 = sand.u32 %s44, 1
          %s303 = smul.addr %s302, 128
          %s304 = scalar_lea.vmem [#allocation6], %s303
          %s305 = smul.u32 16, %s29
          %307 = vsyncadd %s301, 0
          %s308 = smul.addr %s305, 8
          %s309 = scalar_lea.hbm %s0, %s308
          %s310 = sshll.u32 %s309, 4
          %s311 = int_to_ptr.hbm [resolvable:$true] %s310
          %s312 = sshll.u32 %s304, 4
          %s313 = int_to_ptr.vmem [resolvable:$true] %s312
          %318 = dma.hbm_to_vmem [thread:$0]  %s311, 2048, %s313, %s301, 128, 128, 8
        $region44: #{tpu_custom_call.1} parent=39 // pred_fallthru
          _
      $region40: #{tpu_custom_call.1} parent=5 // pred_fallthru
        _
      %p319 = scmp.le.s32.totalorder 1, %s22
      %p320 = scmp.lt.s32.totalorder %s22, 3
      %p321 = pnand %p319, %p320
      %p322 = pneg %p321
      // Predicated region
      $region45: #{tpu_custom_call.1} parent=5 // pred_check
        _
      $region46: #{tpu_custom_call.1} parent=5 // pred_check_branch
        %324 = sbr.rel (%p321) target = $region48
      $region47: #{tpu_custom_call.1} parent=5 // pred_region
        %s325 = ssub.s32 %s22, 1
        %s326 = sand.u32 %s47, 1
        %s327 = scalar_lea.sflag [#allocation7], %s326
        %s328 = sand.u32 %s47, 1
        %s329 = smul.addr %s328, 128
        %s330 = scalar_lea.vmem [#allocation6], %s329
        // Predicated region
        $region49: #{tpu_custom_call.1} parent=47 // pred_check
          %p331 = pneg %p60
        $region50: #{tpu_custom_call.1} parent=47 // pred_check_branch
          %333 = sbr.rel (%p331) target = $region52
        $region51: #{tpu_custom_call.1} parent=47 // pred_region
          %335 = dma.done %s327, 2048
        $region52: #{tpu_custom_call.1} parent=47 // pred_fallthru
          _
        // Predicated region
        $region53: #{tpu_custom_call.1} parent=47 // pred_check
          %p336 = pneg %p128
        $region54: #{tpu_custom_call.1} parent=47 // pred_check_branch
          %338 = sbr.rel (%p336) target = $region56
        $region55: #{tpu_custom_call.1} parent=47 // pred_region
          %340 = dma.done [#allocation10], 2048
        $region56: #{tpu_custom_call.1} parent=47 // pred_fallthru
          _
        // Predicated region
        $region57: #{tpu_custom_call.1} parent=47 // pred_check
          %p341 = pneg %p180
        $region58: #{tpu_custom_call.1} parent=47 // pred_check_branch
          %343 = sbr.rel (%p341) target = $region60
        $region59: #{tpu_custom_call.1} parent=47 // pred_region
          %345 = dma.done [#allocation10], 2048
        $region60: #{tpu_custom_call.1} parent=47 // pred_fallthru
          _
        %s346 = sand.u32 %s47, 1
        %s347 = scalar_lea.sflag [#allocation7], %s346
        %s348 = sand.u32 %s47, 1
        %s349 = smul.addr %s348, 128
        %s350 = scalar_lea.vmem [#allocation6], %s349
        %p351 = pneg %p60
        %p352 = pneg %p57
        %p353 = pneg %p81
        %p354 = pneg %p78
        %p355 = pneg %p102
        %p356 = pneg %p99
        %p357 = pneg %p128
        %p358 = pneg %p125
        %s359 = smul.u32 2, %s32
        %p360 = scmp.lt.s32.totalorder %s359, 1
        %s361 = scalar_select %p360, %s359, 1
        %s362 = scalar_lea.vmem %s4, %s361
        %p363 = pneg %p154
        %p364 = pneg %p151
        %p365 = pneg %p180
        %p366 = pneg %p177
        %p367 = pneg %p201
        %p368 = pneg %p198
        %p369 = pneg %p227
        %p370 = pneg %p224
        %s371 = sand.u32 %s214, 1
        %s372 = scalar_lea.sflag [#allocation8], %s371
        %s373 = sand.u32 %s214, 1
        %s374 = smul.addr %s373, 128
        %s375 = scalar_lea.vmem [#allocation12], %s374
        %s376 = smul.u32 16, %s31
        %s377 = smul.u32 2, %s32
        %s378 = smul.u32 2, %s32
        %p379 = scmp.lt.s32.totalorder %s378, 1
        %s380 = scalar_select %p379, %s378, 1
        %s381 = scalar_lea.vmem %s4, %s380
        %s382 = smul.u32 2, %s32
        %s383 = smul.u32 32, %s32
        %s384 = smul.u32 16, %s31
        %p385 = scmp.eq.s32.totalorder %s32, 0
        // Predicated region
        $region61: #{tpu_custom_call.1} parent=47 // pred_check
          %p386 = pneg %p385
        $region62: #{tpu_custom_call.1} parent=47 // pred_check_branch
          %388 = sbr.rel (%p386) target = $region64
        $region63: #{tpu_custom_call.1} parent=47 // pred_region
          %v389 = vld [vmem:[%s330] sm:$0xff]
          %v390 = vld [vmem:[%s330 + $0x8] sm:$0xff]
          %v391 = vld [vmem:[%s330 + $0x10] sm:$0xff]
          %v392 = vld [vmem:[%s330 + $0x18] sm:$0xff]
          %v393 = vld [vmem:[%s330 + $0x20] sm:$0xff]
          %v394 = vld [vmem:[%s330 + $0x28] sm:$0xff]
          %v395 = vld [vmem:[%s330 + $0x30] sm:$0xff]
          %v396 = vld [vmem:[%s330 + $0x38] sm:$0xff]
          %v397 = vld [vmem:[%s330 + $0x40] sm:$0xff]
          %v398 = vld [vmem:[%s330 + $0x48] sm:$0xff]
          %v399 = vld [vmem:[%s330 + $0x50] sm:$0xff]
          %v400 = vld [vmem:[%s330 + $0x58] sm:$0xff]
          %v401 = vld [vmem:[%s330 + $0x60] sm:$0xff]
          %v402 = vld [vmem:[%s330 + $0x68] sm:$0xff]
          %v403 = vld [vmem:[%s330 + $0x70] sm:$0xff]
          %v404 = vld [vmem:[%s330 + $0x78] sm:$0xff]
          %405 = vadd.xlane.f32.xlu0 %v389
          %v406 = vpop.xlane.xlu0 %405
          %407 = vadd.xlane.f32.xlu0 %v390
          %v408 = vpop.xlane.xlu0 %407
          %409 = vadd.xlane.f32.xlu0 %v391
          %v410 = vpop.xlane.xlu0 %409
          %411 = vadd.xlane.f32.xlu0 %v392
          %v412 = vpop.xlane.xlu0 %411
          %413 = vadd.xlane.f32.xlu0 %v393
          %v414 = vpop.xlane.xlu0 %413
          %415 = vadd.xlane.f32.xlu0 %v394
          %v416 = vpop.xlane.xlu0 %415
          %417 = vadd.xlane.f32.xlu0 %v395
          %v418 = vpop.xlane.xlu0 %417
          %419 = vadd.xlane.f32.xlu0 %v396
          %v420 = vpop.xlane.xlu0 %419
          %421 = vadd.xlane.f32.xlu0 %v397
          %v422 = vpop.xlane.xlu0 %421
          %423 = vadd.xlane.f32.xlu0 %v398
          %v424 = vpop.xlane.xlu0 %423
          %425 = vadd.xlane.f32.xlu0 %v399
          %v426 = vpop.xlane.xlu0 %425
          %427 = vadd.xlane.f32.xlu0 %v400
          %v428 = vpop.xlane.xlu0 %427
          %429 = vadd.xlane.f32.xlu0 %v401
          %v430 = vpop.xlane.xlu0 %429
          %431 = vadd.xlane.f32.xlu0 %v402
          %v432 = vpop.xlane.xlu0 %431
          %433 = vadd.xlane.f32.xlu0 %v403
          %v434 = vpop.xlane.xlu0 %433
          %435 = vadd.xlane.f32.xlu0 %v404
          %v436 = vpop.xlane.xlu0 %435
          %v437 = vrcp.pop 128.0
          %v438 = vmul.f32 128.0, %v437
          %v439 = vsub.f32 1.0, %v438
          %v440 = vmul.f32 %v437, %v439
          %v441 = vadd.f32 %v437, %v440
          %vm442 = vweird.f32 %v437
          %v443 = vsel %vm442, %v437, %v441
          %v444 = vmul.f32 %v406, %v443
          %v445 = vmul.f32 %v408, %v443
          %v446 = vmul.f32 %v410, %v443
          %v447 = vmul.f32 %v412, %v443
          %v448 = vmul.f32 %v414, %v443
          %v449 = vmul.f32 %v416, %v443
          %v450 = vmul.f32 %v418, %v443
          %v451 = vmul.f32 %v420, %v443
          %v452 = vmul.f32 %v422, %v443
          %v453 = vmul.f32 %v424, %v443
          %v454 = vmul.f32 %v426, %v443
          %v455 = vmul.f32 %v428, %v443
          %v456 = vmul.f32 %v430, %v443
          %v457 = vmul.f32 %v432, %v443
          %v458 = vmul.f32 %v434, %v443
          %v459 = vmul.f32 %v436, %v443
          %v460 = vsub.f32 %v389, %v444
          %v461 = vsub.f32 %v390, %v445
          %v462 = vsub.f32 %v391, %v446
          %v463 = vsub.f32 %v392, %v447
          %v464 = vsub.f32 %v393, %v448
          %v465 = vsub.f32 %v394, %v449
          %v466 = vsub.f32 %v395, %v450
          %v467 = vsub.f32 %v396, %v451
          %v468 = vsub.f32 %v397, %v452
          %v469 = vsub.f32 %v398, %v453
          %v470 = vsub.f32 %v399, %v454
          %v471 = vsub.f32 %v400, %v455
          %v472 = vsub.f32 %v401, %v456
          %v473 = vsub.f32 %v402, %v457
          %v474 = vsub.f32 %v403, %v458
          %v475 = vsub.f32 %v404, %v459
          %v476 = vmul.f32 %v460, %v460
          %v477 = vmul.f32 %v461, %v461
          %v478 = vmul.f32 %v462, %v462
          %v479 = vmul.f32 %v463, %v463
          %v480 = vmul.f32 %v464, %v464
          %v481 = vmul.f32 %v465, %v465
          %v482 = vmul.f32 %v466, %v466
          %v483 = vmul.f32 %v467, %v467
          %v484 = vmul.f32 %v468, %v468
          %v485 = vmul.f32 %v469, %v469
          %v486 = vmul.f32 %v470, %v470
          %v487 = vmul.f32 %v471, %v471
          %v488 = vmul.f32 %v472, %v472
          %v489 = vmul.f32 %v473, %v473
          %v490 = vmul.f32 %v474, %v474
          %v491 = vmul.f32 %v475, %v475
          %492 = vadd.xlane.f32.xlu0 %v476
          %v493 = vpop.xlane.xlu0 %492
          %494 = vadd.xlane.f32.xlu0 %v477
          %v495 = vpop.xlane.xlu0 %494
          %496 = vadd.xlane.f32.xlu0 %v478
          %v497 = vpop.xlane.xlu0 %496
          %498 = vadd.xlane.f32.xlu0 %v479
          %v499 = vpop.xlane.xlu0 %498
          %500 = vadd.xlane.f32.xlu0 %v480
          %v501 = vpop.xlane.xlu0 %500
          %502 = vadd.xlane.f32.xlu0 %v481
          %v503 = vpop.xlane.xlu0 %502
          %504 = vadd.xlane.f32.xlu0 %v482
          %v505 = vpop.xlane.xlu0 %504
          %506 = vadd.xlane.f32.xlu0 %v483
          %v507 = vpop.xlane.xlu0 %506
          %508 = vadd.xlane.f32.xlu0 %v484
          %v509 = vpop.xlane.xlu0 %508
          %510 = vadd.xlane.f32.xlu0 %v485
          %v511 = vpop.xlane.xlu0 %510
          %512 = vadd.xlane.f32.xlu0 %v486
          %v513 = vpop.xlane.xlu0 %512
          %514 = vadd.xlane.f32.xlu0 %v487
          %v515 = vpop.xlane.xlu0 %514
          %516 = vadd.xlane.f32.xlu0 %v488
          %v517 = vpop.xlane.xlu0 %516
          %518 = vadd.xlane.f32.xlu0 %v489
          %v519 = vpop.xlane.xlu0 %518
          %520 = vadd.xlane.f32.xlu0 %v490
          %v521 = vpop.xlane.xlu0 %520
          %522 = vadd.xlane.f32.xlu0 %v491
          %v523 = vpop.xlane.xlu0 %522
          %v524 = vmul.f32 %v493, 0.007874016
          %v525 = vmul.f32 %v495, 0.007874016
          %v526 = vmul.f32 %v497, 0.007874016
          %v527 = vmul.f32 %v499, 0.007874016
          %v528 = vmul.f32 %v501, 0.007874016
          %v529 = vmul.f32 %v503, 0.007874016
          %v530 = vmul.f32 %v505, 0.007874016
          %v531 = vmul.f32 %v507, 0.007874016
          %v532 = vmul.f32 %v509, 0.007874016
          %v533 = vmul.f32 %v511, 0.007874016
          %v534 = vmul.f32 %v513, 0.007874016
          %v535 = vmul.f32 %v515, 0.007874016
          %v536 = vmul.f32 %v517, 0.007874016
          %v537 = vmul.f32 %v519, 0.007874016
          %v538 = vmul.f32 %v521, 0.007874016
          %v539 = vmul.f32 %v523, 0.007874016
          %v540 = vrsqrt.pop %v524
          %v541 = vmul.f32 %v540, %v524
          %v542 = vmul.f32 %v541, %v540
          %v543 = vmul.f32 0.5, %v542
          %v544 = vsub.f32 1.5, %v543
          %v545 = vmul.f32 %v540, %v544
          %v546 = vmul.f32 %v524, %v545
          %vm547 = vcmp.eq.f32.partialorder %v524, inf
          %v548 = vsel %vm547, %v524, %v546
          %vm549 = vcmp.eq.f32.partialorder %v524, 0.0
          %v550 = vand.u32 %v524, 2147483648
          %v551 = vsel %vm549, %v550, %v548
          %v552 = vrsqrt.pop %v525
          %v553 = vmul.f32 %v552, %v525
          %v554 = vmul.f32 %v553, %v552
          %v555 = vmul.f32 0.5, %v554
          %v556 = vsub.f32 1.5, %v555
          %v557 = vmul.f32 %v552, %v556
          %v558 = vmul.f32 %v525, %v557
          %vm559 = vcmp.eq.f32.partialorder %v525, inf
          %v560 = vsel %vm559, %v525, %v558
          %vm561 = vcmp.eq.f32.partialorder %v525, 0.0
          %v562 = vand.u32 %v525, 2147483648
          %v563 = vsel %vm561, %v562, %v560
          %v564 = vrsqrt.pop %v526
          %v565 = vmul.f32 %v564, %v526
          %v566 = vmul.f32 %v565, %v564
          %v567 = vmul.f32 0.5, %v566
          %v568 = vsub.f32 1.5, %v567
          %v569 = vmul.f32 %v564, %v568
          %v570 = vmul.f32 %v526, %v569
          %vm571 = vcmp.eq.f32.partialorder %v526, inf
          %v572 = vsel %vm571, %v526, %v570
          %vm573 = vcmp.eq.f32.partialorder %v526, 0.0
          %v574 = vand.u32 %v526, 2147483648
          %v575 = vsel %vm573, %v574, %v572
          %v576 = vrsqrt.pop %v527
          %v577 = vmul.f32 %v576, %v527
          %v578 = vmul.f32 %v577, %v576
          %v579 = vmul.f32 0.5, %v578
          %v580 = vsub.f32 1.5, %v579
          %v581 = vmul.f32 %v576, %v580
          %v582 = vmul.f32 %v527, %v581
          %vm583 = vcmp.eq.f32.partialorder %v527, inf
          %v584 = vsel %vm583, %v527, %v582
          %vm585 = vcmp.eq.f32.partialorder %v527, 0.0
          %v586 = vand.u32 %v527, 2147483648
          %v587 = vsel %vm585, %v586, %v584
          %v588 = vrsqrt.pop %v528
          %v589 = vmul.f32 %v588, %v528
          %v590 = vmul.f32 %v589, %v588
          %v591 = vmul.f32 0.5, %v590
          %v592 = vsub.f32 1.5, %v591
          %v593 = vmul.f32 %v588, %v592
          %v594 = vmul.f32 %v528, %v593
          %vm595 = vcmp.eq.f32.partialorder %v528, inf
          %v596 = vsel %vm595, %v528, %v594
          %vm597 = vcmp.eq.f32.partialorder %v528, 0.0
          %v598 = vand.u32 %v528, 2147483648
          %v599 = vsel %vm597, %v598, %v596
          %v600 = vrsqrt.pop %v529
          %v601 = vmul.f32 %v600, %v529
          %v602 = vmul.f32 %v601, %v600
          %v603 = vmul.f32 0.5, %v602
          %v604 = vsub.f32 1.5, %v603
          %v605 = vmul.f32 %v600, %v604
          %v606 = vmul.f32 %v529, %v605
          %vm607 = vcmp.eq.f32.partialorder %v529, inf
          %v608 = vsel %vm607, %v529, %v606
          %vm609 = vcmp.eq.f32.partialorder %v529, 0.0
          %v610 = vand.u32 %v529, 2147483648
          %v611 = vsel %vm609, %v610, %v608
          %v612 = vrsqrt.pop %v530
          %v613 = vmul.f32 %v612, %v530
          %v614 = vmul.f32 %v613, %v612
          %v615 = vmul.f32 0.5, %v614
          %v616 = vsub.f32 1.5, %v615
          %v617 = vmul.f32 %v612, %v616
          %v618 = vmul.f32 %v530, %v617
          %vm619 = vcmp.eq.f32.partialorder %v530, inf
          %v620 = vsel %vm619, %v530, %v618
          %vm621 = vcmp.eq.f32.partialorder %v530, 0.0
          %v622 = vand.u32 %v530, 2147483648
          %v623 = vsel %vm621, %v622, %v620
          %v624 = vrsqrt.pop %v531
          %v625 = vmul.f32 %v624, %v531
          %v626 = vmul.f32 %v625, %v624
          %v627 = vmul.f32 0.5, %v626
          %v628 = vsub.f32 1.5, %v627
          %v629 = vmul.f32 %v624, %v628
          %v630 = vmul.f32 %v531, %v629
          %vm631 = vcmp.eq.f32.partialorder %v531, inf
          %v632 = vsel %vm631, %v531, %v630
          %vm633 = vcmp.eq.f32.partialorder %v531, 0.0
          %v634 = vand.u32 %v531, 2147483648
          %v635 = vsel %vm633, %v634, %v632
          %v636 = vrsqrt.pop %v532
          %v637 = vmul.f32 %v636, %v532
          %v638 = vmul.f32 %v637, %v636
          %v639 = vmul.f32 0.5, %v638
          %v640 = vsub.f32 1.5, %v639
          %v641 = vmul.f32 %v636, %v640
          %v642 = vmul.f32 %v532, %v641
          %vm643 = vcmp.eq.f32.partialorder %v532, inf
          %v644 = vsel %vm643, %v532, %v642
          %vm645 = vcmp.eq.f32.partialorder %v532, 0.0
          %v646 = vand.u32 %v532, 2147483648
          %v647 = vsel %vm645, %v646, %v644
          %v648 = vrsqrt.pop %v533
          %v649 = vmul.f32 %v648, %v533
          %v650 = vmul.f32 %v649, %v648
          %v651 = vmul.f32 0.5, %v650
          %v652 = vsub.f32 1.5, %v651
          %v653 = vmul.f32 %v648, %v652
          %v654 = vmul.f32 %v533, %v653
          %vm655 = vcmp.eq.f32.partialorder %v533, inf
          %v656 = vsel %vm655, %v533, %v654
          %vm657 = vcmp.eq.f32.partialorder %v533, 0.0
          %v658 = vand.u32 %v533, 2147483648
          %v659 = vsel %vm657, %v658, %v656
          %v660 = vrsqrt.pop %v534
          %v661 = vmul.f32 %v660, %v534
          %v662 = vmul.f32 %v661, %v660
          %v663 = vmul.f32 0.5, %v662
          %v664 = vsub.f32 1.5, %v663
          %v665 = vmul.f32 %v660, %v664
          %v666 = vmul.f32 %v534, %v665
          %vm667 = vcmp.eq.f32.partialorder %v534, inf
          %v668 = vsel %vm667, %v534, %v666
          %vm669 = vcmp.eq.f32.partialorder %v534, 0.0
          %v670 = vand.u32 %v534, 2147483648
          %v671 = vsel %vm669, %v670, %v668
          %v672 = vrsqrt.pop %v535
          %v673 = vmul.f32 %v672, %v535
          %v674 = vmul.f32 %v673, %v672
          %v675 = vmul.f32 0.5, %v674
          %v676 = vsub.f32 1.5, %v675
          %v677 = vmul.f32 %v672, %v676
          %v678 = vmul.f32 %v535, %v677
          %vm679 = vcmp.eq.f32.partialorder %v535, inf
          %v680 = vsel %vm679, %v535, %v678
          %vm681 = vcmp.eq.f32.partialorder %v535, 0.0
          %v682 = vand.u32 %v535, 2147483648
          %v683 = vsel %vm681, %v682, %v680
          %v684 = vrsqrt.pop %v536
          %v685 = vmul.f32 %v684, %v536
          %v686 = vmul.f32 %v685, %v684
          %v687 = vmul.f32 0.5, %v686
          %v688 = vsub.f32 1.5, %v687
          %v689 = vmul.f32 %v684, %v688
          %v690 = vmul.f32 %v536, %v689
          %vm691 = vcmp.eq.f32.partialorder %v536, inf
          %v692 = vsel %vm691, %v536, %v690
          %vm693 = vcmp.eq.f32.partialorder %v536, 0.0
          %v694 = vand.u32 %v536, 2147483648
          %v695 = vsel %vm693, %v694, %v692
          %v696 = vrsqrt.pop %v537
          %v697 = vmul.f32 %v696, %v537
          %v698 = vmul.f32 %v697, %v696
          %v699 = vmul.f32 0.5, %v698
          %v700 = vsub.f32 1.5, %v699
          %v701 = vmul.f32 %v696, %v700
          %v702 = vmul.f32 %v537, %v701
          %vm703 = vcmp.eq.f32.partialorder %v537, inf
          %v704 = vsel %vm703, %v537, %v702
          %vm705 = vcmp.eq.f32.partialorder %v537, 0.0
          %v706 = vand.u32 %v537, 2147483648
          %v707 = vsel %vm705, %v706, %v704
          %v708 = vrsqrt.pop %v538
          %v709 = vmul.f32 %v708, %v538
          %v710 = vmul.f32 %v709, %v708
          %v711 = vmul.f32 0.5, %v710
          %v712 = vsub.f32 1.5, %v711
          %v713 = vmul.f32 %v708, %v712
          %v714 = vmul.f32 %v538, %v713
          %vm715 = vcmp.eq.f32.partialorder %v538, inf
          %v716 = vsel %vm715, %v538, %v714
          %vm717 = vcmp.eq.f32.partialorder %v538, 0.0
          %v718 = vand.u32 %v538, 2147483648
          %v719 = vsel %vm717, %v718, %v716
          %v720 = vrsqrt.pop %v539
          %v721 = vmul.f32 %v720, %v539
          %v722 = vmul.f32 %v721, %v720
          %v723 = vmul.f32 0.5, %v722
          %v724 = vsub.f32 1.5, %v723
          %v725 = vmul.f32 %v720, %v724
          %v726 = vmul.f32 %v539, %v725
          %vm727 = vcmp.eq.f32.partialorder %v539, inf
          %v728 = vsel %vm727, %v539, %v726
          %vm729 = vcmp.eq.f32.partialorder %v539, 0.0
          %v730 = vand.u32 %v539, 2147483648
          %v731 = vsel %vm729, %v730, %v728
          %v732 = vadd.f32 %v551, 1e-06
          %v733 = vadd.f32 %v563, 1e-06
          %v734 = vadd.f32 %v575, 1e-06
          %v735 = vadd.f32 %v587, 1e-06
          %v736 = vadd.f32 %v599, 1e-06
          %v737 = vadd.f32 %v611, 1e-06
          %v738 = vadd.f32 %v623, 1e-06
          %v739 = vadd.f32 %v635, 1e-06
          %v740 = vadd.f32 %v647, 1e-06
          %v741 = vadd.f32 %v659, 1e-06
          %v742 = vadd.f32 %v671, 1e-06
          %v743 = vadd.f32 %v683, 1e-06
          %v744 = vadd.f32 %v695, 1e-06
          %v745 = vadd.f32 %v707, 1e-06
          %v746 = vadd.f32 %v719, 1e-06
          %v747 = vadd.f32 %v731, 1e-06
          %v748 = vrcp.pop %v732
          %v749 = vrcp.pop %v733
          %v750 = vrcp.pop %v734
          %v751 = vrcp.pop %v735
          %v752 = vrcp.pop %v736
          %v753 = vrcp.pop %v737
          %v754 = vrcp.pop %v738
          %v755 = vrcp.pop %v739
          %v756 = vrcp.pop %v740
          %v757 = vrcp.pop %v741
          %v758 = vrcp.pop %v742
          %v759 = vrcp.pop %v743
          %v760 = vrcp.pop %v744
          %v761 = vrcp.pop %v745
          %v762 = vrcp.pop %v746
          %v763 = vrcp.pop %v747
          %s764 = sld [smem:[#allocation4]]
          %v765 = vstv %s764
          %v766 = vmul.f32 %v765, %v460
          %v767 = vmul.f32 %v765, %v461
          %v768 = vmul.f32 %v765, %v462
          %v769 = vmul.f32 %v765, %v463
          %v770 = vmul.f32 %v765, %v464
          %v771 = vmul.f32 %v765, %v465
          %v772 = vmul.f32 %v765, %v466
          %v773 = vmul.f32 %v765, %v467
          %v774 = vmul.f32 %v765, %v468
          %v775 = vmul.f32 %v765, %v469
          %v776 = vmul.f32 %v765, %v470
          %v777 = vmul.f32 %v765, %v471
          %v778 = vmul.f32 %v765, %v472
          %v779 = vmul.f32 %v765, %v473
          %v780 = vmul.f32 %v765, %v474
          %v781 = vmul.f32 %v765, %v475
          %v782 = vmul.f32 %v766, %v748
          %v783 = vmul.f32 %v767, %v749
          %v784 = vmul.f32 %v768, %v750
          %v785 = vmul.f32 %v769, %v751
          %v786 = vmul.f32 %v770, %v752
          %v787 = vmul.f32 %v771, %v753
          %v788 = vmul.f32 %v772, %v754
          %v789 = vmul.f32 %v773, %v755
          %v790 = vmul.f32 %v774, %v756
          %v791 = vmul.f32 %v775, %v757
          %v792 = vmul.f32 %v776, %v758
          %v793 = vmul.f32 %v777, %v759
          %v794 = vmul.f32 %v778, %v760
          %v795 = vmul.f32 %v779, %v761
          %v796 = vmul.f32 %v780, %v762
          %v797 = vmul.f32 %v781, %v763
          %s798 = sld [smem:[#allocation5]]
          %v799 = vstv %s798
          %v800 = vadd.f32 %v782, %v799
          %v801 = vadd.f32 %v783, %v799
          %v802 = vadd.f32 %v784, %v799
          %v803 = vadd.f32 %v785, %v799
          %v804 = vadd.f32 %v786, %v799
          %v805 = vadd.f32 %v787, %v799
          %v806 = vadd.f32 %v788, %v799
          %v807 = vadd.f32 %v789, %v799
          %v808 = vadd.f32 %v790, %v799
          %v809 = vadd.f32 %v791, %v799
          %v810 = vadd.f32 %v792, %v799
          %v811 = vadd.f32 %v793, %v799
          %v812 = vadd.f32 %v794, %v799
          %v813 = vadd.f32 %v795, %v799
          %v814 = vadd.f32 %v796, %v799
          %v815 = vadd.f32 %v797, %v799
          %v816 = vpack.c.bf16 %v800, %v800
          %v817 = vpack.c.bf16 %v801, %v801
          %v818 = vpack.c.bf16 %v802, %v802
          %v819 = vpack.c.bf16 %v803, %v803
          %v820 = vpack.c.bf16 %v804, %v804
          %v821 = vpack.c.bf16 %v805, %v805
          %v822 = vpack.c.bf16 %v806, %v806
          %v823 = vpack.c.bf16 %v807, %v807
          %v824 = vpack.c.bf16 %v808, %v808
          %v825 = vpack.c.bf16 %v809, %v809
          %v826 = vpack.c.bf16 %v810, %v810
          %v827 = vpack.c.bf16 %v811, %v811
          %v828 = vpack.c.bf16 %v812, %v812
          %v829 = vpack.c.bf16 %v813, %v813
          %v830 = vpack.c.bf16 %v814, %v814
          %v831 = vpack.c.bf16 %v815, %v815
          %832 = vst [vmem:[#allocation2] sm:$0xf] %v816
          %833 = vst [vmem:[#allocation2 + $0x4] sm:$0xf] %v817
          %834 = vst [vmem:[#allocation2 + $0x8] sm:$0xf] %v818
          %835 = vst [vmem:[#allocation2 + $0xc] sm:$0xf] %v819
          %836 = vst [vmem:[#allocation2 + $0x10] sm:$0xf] %v820
          %837 = vst [vmem:[#allocation2 + $0x14] sm:$0xf] %v821
          %838 = vst [vmem:[#allocation2 + $0x18] sm:$0xf] %v822
          %839 = vst [vmem:[#allocation2 + $0x1c] sm:$0xf] %v823
          %840 = vst [vmem:[#allocation2 + $0x20] sm:$0xf] %v824
          %841 = vst [vmem:[#allocation2 + $0x24] sm:$0xf] %v825
          %842 = vst [vmem:[#allocation2 + $0x28] sm:$0xf] %v826
          %843 = vst [vmem:[#allocation2 + $0x2c] sm:$0xf] %v827
          %844 = vst [vmem:[#allocation2 + $0x30] sm:$0xf] %v828
          %845 = vst [vmem:[#allocation2 + $0x34] sm:$0xf] %v829
          %846 = vst [vmem:[#allocation2 + $0x38] sm:$0xf] %v830
          %847 = vst [vmem:[#allocation2 + $0x3c] sm:$0xf] %v831
          %848 = vst [vmem:[#allocation3] sm:$0xff] 0.0
          %849 = vst [vmem:[#allocation3 + $0x8] sm:$0xff] 0.0
          %850 = vst [vmem:[#allocation3 + $0x10] sm:$0xff] 0.0
          %851 = vst [vmem:[#allocation3 + $0x18] sm:$0xff] 0.0
          %852 = vst [vmem:[#allocation3 + $0x20] sm:$0xff] 0.0
          %853 = vst [vmem:[#allocation3 + $0x28] sm:$0xff] 0.0
          %854 = vst [vmem:[#allocation3 + $0x30] sm:$0xff] 0.0
          %855 = vst [vmem:[#allocation3 + $0x38] sm:$0xff] 0.0
          %856 = vst [vmem:[#allocation3 + $0x40] sm:$0xff] 0.0
          %857 = vst [vmem:[#allocation3 + $0x48] sm:$0xff] 0.0
          %858 = vst [vmem:[#allocation3 + $0x50] sm:$0xff] 0.0
          %859 = vst [vmem:[#allocation3 + $0x58] sm:$0xff] 0.0
          %860 = vst [vmem:[#allocation3 + $0x60] sm:$0xff] 0.0
          %861 = vst [vmem:[#allocation3 + $0x68] sm:$0xff] 0.0
          %862 = vst [vmem:[#allocation3 + $0x70] sm:$0xff] 0.0
          %863 = vst [vmem:[#allocation3 + $0x78] sm:$0xff] 0.0
        $region64: #{tpu_custom_call.1} parent=47 // pred_fallthru
          _
        %v864 = vld [vmem:[#allocation2] sm:$0xf]
        %v865 = vld [vmem:[#allocation2 + $0x4] sm:$0xf]
        %v866 = vld [vmem:[#allocation2 + $0x8] sm:$0xf]
        %v867 = vld [vmem:[#allocation2 + $0xc] sm:$0xf]
        %v868 = vld [vmem:[#allocation2 + $0x10] sm:$0xf]
        %v869 = vld [vmem:[#allocation2 + $0x14] sm:$0xf]
        %v870 = vld [vmem:[#allocation2 + $0x18] sm:$0xf]
        %v871 = vld [vmem:[#allocation2 + $0x1c] sm:$0xf]
        %v872 = vld [vmem:[#allocation2 + $0x20] sm:$0xf]
        %v873 = vld [vmem:[#allocation2 + $0x24] sm:$0xf]
        %v874 = vld [vmem:[#allocation2 + $0x28] sm:$0xf]
        %v875 = vld [vmem:[#allocation2 + $0x2c] sm:$0xf]
        %v876 = vld [vmem:[#allocation2 + $0x30] sm:$0xf]
        %v877 = vld [vmem:[#allocation2 + $0x34] sm:$0xf]
        %v878 = vld [vmem:[#allocation2 + $0x38] sm:$0xf]
        %v879 = vld [vmem:[#allocation2 + $0x3c] sm:$0xf]
        %v880 = vld [vmem:[#allocation9] sm:$0xff]
        %v881 = vld [vmem:[#allocation9 + $0x8] sm:$0xff]
        %v882 = vld [vmem:[#allocation9 + $0x10] sm:$0xff]
        %v883 = vld [vmem:[#allocation9 + $0x18] sm:$0xff]
        %v884 = vld [vmem:[#allocation9 + $0x20] sm:$0xff]
        %v885 = vld [vmem:[#allocation9 + $0x28] sm:$0xff]
        %v886 = vld [vmem:[#allocation9 + $0x30] sm:$0xff]
        %v887 = vld [vmem:[#allocation9 + $0x38] sm:$0xff]
        %v888 = vld [vmem:[#allocation9 + $0x40] sm:$0xff]
        %v889 = vld [vmem:[#allocation9 + $0x48] sm:$0xff]
        %v890 = vld [vmem:[#allocation9 + $0x50] sm:$0xff]
        %v891 = vld [vmem:[#allocation9 + $0x58] sm:$0xff]
        %v892 = vld [vmem:[#allocation9 + $0x60] sm:$0xff]
        %v893 = vld [vmem:[#allocation9 + $0x68] sm:$0xff]
        %v894 = vld [vmem:[#allocation9 + $0x70] sm:$0xff]
        %v895 = vld [vmem:[#allocation9 + $0x78] sm:$0xff]
        %v896 = vld [vmem:[%s381] sm:$0x3]
        %v898 = vperm.slane %v896, 0
        %v899 = vperm.slane %v896, 1
        %v918 = vunpack.c.l.b16 %v864
        %v919 = vunpack.c.l.b16 %v865
        %v920 = vunpack.c.l.b16 %v866
        %v921 = vunpack.c.l.b16 %v867
        %v922 = vunpack.c.l.b16 %v868
        %v923 = vunpack.c.l.b16 %v869
        %v924 = vunpack.c.l.b16 %v870
        %v925 = vunpack.c.l.b16 %v871
        %v926 = vunpack.c.l.b16 %v872
        %v927 = vunpack.c.l.b16 %v873
        %v928 = vunpack.c.l.b16 %v874
        %v929 = vunpack.c.l.b16 %v875
        %v930 = vunpack.c.l.b16 %v876
        %v931 = vunpack.c.l.b16 %v877
        %v932 = vunpack.c.l.b16 %v878
        %v933 = vunpack.c.l.b16 %v879
        %v934 = vpack.c.b16 %v919, %v918
        %v935 = vpack.c.b16 %v921, %v920
        %v936 = vpack.c.b16 %v923, %v922
        %v937 = vpack.c.b16 %v925, %v924
        %v938 = vpack.c.b16 %v927, %v926
        %v939 = vpack.c.b16 %v929, %v928
        %v940 = vpack.c.b16 %v931, %v930
        %v941 = vpack.c.b16 %v933, %v932
        %v966 = vunpack.c.l.b16 %v880
        %v967 = vunpack.c.h.b16 %v880
        %v968 = vunpack.c.l.b16 %v881
        %v969 = vunpack.c.h.b16 %v881
        %v970 = vunpack.c.l.b16 %v882
        %v971 = vunpack.c.h.b16 %v882
        %v972 = vunpack.c.l.b16 %v883
        %v973 = vunpack.c.h.b16 %v883
        %v974 = vunpack.c.l.b16 %v884
        %v975 = vunpack.c.h.b16 %v884
        %v976 = vunpack.c.l.b16 %v885
        %v977 = vunpack.c.h.b16 %v885
        %v978 = vunpack.c.l.b16 %v886
        %v979 = vunpack.c.h.b16 %v886
        %v980 = vunpack.c.l.b16 %v887
        %v981 = vunpack.c.h.b16 %v887
        %v982 = vunpack.c.l.b16 %v888
        %v983 = vunpack.c.h.b16 %v888
        %v984 = vunpack.c.l.b16 %v889
        %v985 = vunpack.c.h.b16 %v889
        %v986 = vunpack.c.l.b16 %v890
        %v987 = vunpack.c.h.b16 %v890
        %v988 = vunpack.c.l.b16 %v891
        %v989 = vunpack.c.h.b16 %v891
        %v990 = vunpack.c.l.b16 %v892
        %v991 = vunpack.c.h.b16 %v892
        %v992 = vunpack.c.l.b16 %v893
        %v993 = vunpack.c.h.b16 %v893
        %v994 = vunpack.c.l.b16 %v894
        %v995 = vunpack.c.h.b16 %v894
        %v996 = vunpack.c.l.b16 %v895
        %v997 = vunpack.c.h.b16 %v895
        %v998 = vpack.c.b16 %v968, %v966
        %v999 = vpack.c.b16 %v969, %v967
        %v1000 = vpack.c.b16 %v972, %v970
        %v1001 = vpack.c.b16 %v973, %v971
        %v1002 = vpack.c.b16 %v976, %v974
        %v1003 = vpack.c.b16 %v977, %v975
        %v1004 = vpack.c.b16 %v980, %v978
        %v1005 = vpack.c.b16 %v981, %v979
        %v1006 = vpack.c.b16 %v984, %v982
        %v1007 = vpack.c.b16 %v985, %v983
        %v1008 = vpack.c.b16 %v988, %v986
        %v1009 = vpack.c.b16 %v989, %v987
        %v1010 = vpack.c.b16 %v992, %v990
        %v1011 = vpack.c.b16 %v993, %v991
        %v1012 = vpack.c.b16 %v996, %v994
        %v1013 = vpack.c.b16 %v997, %v995
        %1030 = vmatpush.bf16.msra.mxu0 %v1012
        %1031 = vmatpush.bf16.msra.mxu0 %v1010
        %1032 = vmatpush.bf16.msra.mxu0 %v1008
        %1033 = vmatpush.bf16.msra.mxu0 %v1006
        %1034 = vmatpush.bf16.msra.mxu0 %v1004
        %1035 = vmatpush.bf16.msra.mxu0 %v1002
        %1036 = vmatpush.bf16.msra.mxu0 %v1000
        %1037 = vmatpush.bf16.msra.mxu0 %v998
        %1038 = vmatmul.bf16.gmra.mxu0 %v934
        %v1039 = vpop.f32.mrf.mxu0
        %v1040 = vadd.f32 %v898, %v1039
        %v1041 = vpop.f32.mrf.mxu0
        %v1042 = vadd.f32 %v898, %v1041
        %1043 = vmatmul.bf16.gmra.mxu0 %v935
        %v1044 = vpop.f32.mrf.mxu0
        %v1045 = vadd.f32 %v898, %v1044
        %v1046 = vpop.f32.mrf.mxu0
        %v1047 = vadd.f32 %v898, %v1046
        %1048 = vmatmul.bf16.gmra.mxu0 %v936
        %v1049 = vpop.f32.mrf.mxu0
        %v1050 = vadd.f32 %v898, %v1049
        %v1051 = vpop.f32.mrf.mxu0
        %v1052 = vadd.f32 %v898, %v1051
        %1053 = vmatmul.bf16.gmra.mxu0 %v937
        %v1054 = vpop.f32.mrf.mxu0
        %v1055 = vadd.f32 %v898, %v1054
        %v1056 = vpop.f32.mrf.mxu0
        %v1057 = vadd.f32 %v898, %v1056
        %1058 = vmatmul.bf16.gmra.mxu0 %v938
        %v1059 = vpop.f32.mrf.mxu0
        %v1060 = vadd.f32 %v898, %v1059
        %v1061 = vpop.f32.mrf.mxu0
        %v1062 = vadd.f32 %v898, %v1061
        %1063 = vmatmul.bf16.gmra.mxu0 %v939
        %v1064 = vpop.f32.mrf.mxu0
        %v1065 = vadd.f32 %v898, %v1064
        %v1066 = vpop.f32.mrf.mxu0
        %v1067 = vadd.f32 %v898, %v1066
        %1068 = vmatmul.bf16.gmra.mxu0 %v940
        %v1069 = vpop.f32.mrf.mxu0
        %v1070 = vadd.f32 %v898, %v1069
        %v1071 = vpop.f32.mrf.mxu0
        %v1072 = vadd.f32 %v898, %v1071
        %1073 = vmatmul.bf16.gmra.mxu0 %v941
        %v1074 = vpop.f32.mrf.mxu0
        %v1075 = vadd.f32 %v898, %v1074
        %v1076 = vpop.f32.mrf.mxu0
        %v1077 = vadd.f32 %v898, %v1076
        %1078 = vdwg.mxu0
        %1079 = vmatpush.bf16.msra.mxu0 %v1013
        %1080 = vmatpush.bf16.msra.mxu0 %v1011
        %1081 = vmatpush.bf16.msra.mxu0 %v1009
        %1082 = vmatpush.bf16.msra.mxu0 %v1007
        %1083 = vmatpush.bf16.msra.mxu0 %v1005
        %1084 = vmatpush.bf16.msra.mxu0 %v1003
        %1085 = vmatpush.bf16.msra.mxu0 %v1001
        %1086 = vmatpush.bf16.msra.mxu0 %v999
        %1087 = vmatmul.bf16.gmra.mxu0 %v934
        %v1088 = vpop.f32.mrf.mxu0
        %v1089 = vadd.f32 %v899, %v1088
        %v1090 = vpop.f32.mrf.mxu0
        %v1091 = vadd.f32 %v899, %v1090
        %1092 = vmatmul.bf16.gmra.mxu0 %v935
        %v1093 = vpop.f32.mrf.mxu0
        %v1094 = vadd.f32 %v899, %v1093
        %v1095 = vpop.f32.mrf.mxu0
        %v1096 = vadd.f32 %v899, %v1095
        %1097 = vmatmul.bf16.gmra.mxu0 %v936
        %v1098 = vpop.f32.mrf.mxu0
        %v1099 = vadd.f32 %v899, %v1098
        %v1100 = vpop.f32.mrf.mxu0
        %v1101 = vadd.f32 %v899, %v1100
        %1102 = vmatmul.bf16.gmra.mxu0 %v937
        %v1103 = vpop.f32.mrf.mxu0
        %v1104 = vadd.f32 %v899, %v1103
        %v1105 = vpop.f32.mrf.mxu0
        %v1106 = vadd.f32 %v899, %v1105
        %1107 = vmatmul.bf16.gmra.mxu0 %v938
        %v1108 = vpop.f32.mrf.mxu0
        %v1109 = vadd.f32 %v899, %v1108
        %v1110 = vpop.f32.mrf.mxu0
        %v1111 = vadd.f32 %v899, %v1110
        %1112 = vmatmul.bf16.gmra.mxu0 %v939
        %v1113 = vpop.f32.mrf.mxu0
        %v1114 = vadd.f32 %v899, %v1113
        %v1115 = vpop.f32.mrf.mxu0
        %v1116 = vadd.f32 %v899, %v1115
        %1117 = vmatmul.bf16.gmra.mxu0 %v940
        %v1118 = vpop.f32.mrf.mxu0
        %v1119 = vadd.f32 %v899, %v1118
        %v1120 = vpop.f32.mrf.mxu0
        %v1121 = vadd.f32 %v899, %v1120
        %1122 = vmatmul.bf16.gmra.mxu0 %v941
        %v1123 = vpop.f32.mrf.mxu0
        %v1124 = vadd.f32 %v899, %v1123
        %v1125 = vpop.f32.mrf.mxu0
        %v1126 = vadd.f32 %v899, %v1125
        %1127 = vdwg.mxu0
        %v1128 = vmax.f32 %v1040, 0.0
        %v1129 = vmax.f32 %v1089, 0.0
        %v1130 = vmax.f32 %v1042, 0.0
        %v1131 = vmax.f32 %v1091, 0.0
        %v1132 = vmax.f32 %v1045, 0.0
        %v1133 = vmax.f32 %v1094, 0.0
        %v1134 = vmax.f32 %v1047, 0.0
        %v1135 = vmax.f32 %v1096, 0.0
        %v1136 = vmax.f32 %v1050, 0.0
        %v1137 = vmax.f32 %v1099, 0.0
        %v1138 = vmax.f32 %v1052, 0.0
        %v1139 = vmax.f32 %v1101, 0.0
        %v1140 = vmax.f32 %v1055, 0.0
        %v1141 = vmax.f32 %v1104, 0.0
        %v1142 = vmax.f32 %v1057, 0.0
        %v1143 = vmax.f32 %v1106, 0.0
        %v1144 = vmax.f32 %v1060, 0.0
        %v1145 = vmax.f32 %v1109, 0.0
        %v1146 = vmax.f32 %v1062, 0.0
        %v1147 = vmax.f32 %v1111, 0.0
        %v1148 = vmax.f32 %v1065, 0.0
        %v1149 = vmax.f32 %v1114, 0.0
        %v1150 = vmax.f32 %v1067, 0.0
        %v1151 = vmax.f32 %v1116, 0.0
        %v1152 = vmax.f32 %v1070, 0.0
        %v1153 = vmax.f32 %v1119, 0.0
        %v1154 = vmax.f32 %v1072, 0.0
        %v1155 = vmax.f32 %v1121, 0.0
        %v1156 = vmax.f32 %v1075, 0.0
        %v1157 = vmax.f32 %v1124, 0.0
        %v1158 = vmax.f32 %v1077, 0.0
        %v1159 = vmax.f32 %v1126, 0.0
        %v1160 = vld [vmem:[#allocation3] sm:$0xff]
        %v1161 = vld [vmem:[#allocation3 + $0x8] sm:$0xff]
        %v1162 = vld [vmem:[#allocation3 + $0x10] sm:$0xff]
        %v1163 = vld [vmem:[#allocation3 + $0x18] sm:$0xff]
        %v1164 = vld [vmem:[#allocation3 + $0x20] sm:$0xff]
        %v1165 = vld [vmem:[#allocation3 + $0x28] sm:$0xff]
        %v1166 = vld [vmem:[#allocation3 + $0x30] sm:$0xff]
        %v1167 = vld [vmem:[#allocation3 + $0x38] sm:$0xff]
        %v1168 = vld [vmem:[#allocation3 + $0x40] sm:$0xff]
        %v1169 = vld [vmem:[#allocation3 + $0x48] sm:$0xff]
        %v1170 = vld [vmem:[#allocation3 + $0x50] sm:$0xff]
        %v1171 = vld [vmem:[#allocation3 + $0x58] sm:$0xff]
        %v1172 = vld [vmem:[#allocation3 + $0x60] sm:$0xff]
        %v1173 = vld [vmem:[#allocation3 + $0x68] sm:$0xff]
        %v1174 = vld [vmem:[#allocation3 + $0x70] sm:$0xff]
        %v1175 = vld [vmem:[#allocation3 + $0x78] sm:$0xff]
        %v1176 = vpack.c.bf16 %v1130, %v1128
        %v1177 = vpack.c.bf16 %v1131, %v1129
        %v1178 = vpack.c.bf16 %v1134, %v1132
        %v1179 = vpack.c.bf16 %v1135, %v1133
        %v1180 = vpack.c.bf16 %v1138, %v1136
        %v1181 = vpack.c.bf16 %v1139, %v1137
        %v1182 = vpack.c.bf16 %v1142, %v1140
        %v1183 = vpack.c.bf16 %v1143, %v1141
        %v1184 = vpack.c.bf16 %v1146, %v1144
        %v1185 = vpack.c.bf16 %v1147, %v1145
        %v1186 = vpack.c.bf16 %v1150, %v1148
        %v1187 = vpack.c.bf16 %v1151, %v1149
        %v1188 = vpack.c.bf16 %v1154, %v1152
        %v1189 = vpack.c.bf16 %v1155, %v1153
        %v1190 = vpack.c.bf16 %v1158, %v1156
        %v1191 = vpack.c.bf16 %v1159, %v1157
        %v1192 = vld [vmem:[#allocation11] sm:$0xf]
        %v1193 = vld [vmem:[#allocation11 + $0x4] sm:$0xf]
        %v1194 = vld [vmem:[#allocation11 + $0x8] sm:$0xf]
        %v1195 = vld [vmem:[#allocation11 + $0xc] sm:$0xf]
        %v1196 = vld [vmem:[#allocation11 + $0x10] sm:$0xf]
        %v1197 = vld [vmem:[#allocation11 + $0x14] sm:$0xf]
        %v1198 = vld [vmem:[#allocation11 + $0x18] sm:$0xf]
        %v1199 = vld [vmem:[#allocation11 + $0x1c] sm:$0xf]
        %v1200 = vld [vmem:[#allocation11 + $0x20] sm:$0xf]
        %v1201 = vld [vmem:[#allocation11 + $0x24] sm:$0xf]
        %v1202 = vld [vmem:[#allocation11 + $0x28] sm:$0xf]
        %v1203 = vld [vmem:[#allocation11 + $0x2c] sm:$0xf]
        %v1204 = vld [vmem:[#allocation11 + $0x30] sm:$0xf]
        %v1205 = vld [vmem:[#allocation11 + $0x34] sm:$0xf]
        %v1206 = vld [vmem:[#allocation11 + $0x38] sm:$0xf]
        %v1207 = vld [vmem:[#allocation11 + $0x3c] sm:$0xf]
        %v1208 = vld [vmem:[#allocation11 + $0x40] sm:$0xf]
        %v1209 = vld [vmem:[#allocation11 + $0x44] sm:$0xf]
        %v1210 = vld [vmem:[#allocation11 + $0x48] sm:$0xf]
        %v1211 = vld [vmem:[#allocation11 + $0x4c] sm:$0xf]
        %v1212 = vld [vmem:[#allocation11 + $0x50] sm:$0xf]
        %v1213 = vld [vmem:[#allocation11 + $0x54] sm:$0xf]
        %v1214 = vld [vmem:[#allocation11 + $0x58] sm:$0xf]
        %v1215 = vld [vmem:[#allocation11 + $0x5c] sm:$0xf]
        %v1216 = vld [vmem:[#allocation11 + $0x60] sm:$0xf]
        %v1217 = vld [vmem:[#allocation11 + $0x64] sm:$0xf]
        %v1218 = vld [vmem:[#allocation11 + $0x68] sm:$0xf]
        %v1219 = vld [vmem:[#allocation11 + $0x6c] sm:$0xf]
        %v1220 = vld [vmem:[#allocation11 + $0x70] sm:$0xf]
        %v1221 = vld [vmem:[#allocation11 + $0x74] sm:$0xf]
        %v1222 = vld [vmem:[#allocation11 + $0x78] sm:$0xf]
        %v1223 = vld [vmem:[#allocation11 + $0x7c] sm:$0xf]
        %v1256 = vunpack.c.l.b16 %v1192
        %v1257 = vunpack.c.l.b16 %v1193
        %v1258 = vunpack.c.l.b16 %v1194
        %v1259 = vunpack.c.l.b16 %v1195
        %v1260 = vunpack.c.l.b16 %v1196
        %v1261 = vunpack.c.l.b16 %v1197
        %v1262 = vunpack.c.l.b16 %v1198
        %v1263 = vunpack.c.l.b16 %v1199
        %v1264 = vunpack.c.l.b16 %v1200
        %v1265 = vunpack.c.l.b16 %v1201
        %v1266 = vunpack.c.l.b16 %v1202
        %v1267 = vunpack.c.l.b16 %v1203
        %v1268 = vunpack.c.l.b16 %v1204
        %v1269 = vunpack.c.l.b16 %v1205
        %v1270 = vunpack.c.l.b16 %v1206
        %v1271 = vunpack.c.l.b16 %v1207
        %v1272 = vunpack.c.l.b16 %v1208
        %v1273 = vunpack.c.l.b16 %v1209
        %v1274 = vunpack.c.l.b16 %v1210
        %v1275 = vunpack.c.l.b16 %v1211
        %v1276 = vunpack.c.l.b16 %v1212
        %v1277 = vunpack.c.l.b16 %v1213
        %v1278 = vunpack.c.l.b16 %v1214
        %v1279 = vunpack.c.l.b16 %v1215
        %v1280 = vunpack.c.l.b16 %v1216
        %v1281 = vunpack.c.l.b16 %v1217
        %v1282 = vunpack.c.l.b16 %v1218
        %v1283 = vunpack.c.l.b16 %v1219
        %v1284 = vunpack.c.l.b16 %v1220
        %v1285 = vunpack.c.l.b16 %v1221
        %v1286 = vunpack.c.l.b16 %v1222
        %v1287 = vunpack.c.l.b16 %v1223
        %v1288 = vpack.c.b16 %v1257, %v1256
        %v1289 = vpack.c.b16 %v1259, %v1258
        %v1290 = vpack.c.b16 %v1261, %v1260
        %v1291 = vpack.c.b16 %v1263, %v1262
        %v1292 = vpack.c.b16 %v1265, %v1264
        %v1293 = vpack.c.b16 %v1267, %v1266
        %v1294 = vpack.c.b16 %v1269, %v1268
        %v1295 = vpack.c.b16 %v1271, %v1270
        %v1296 = vpack.c.b16 %v1273, %v1272
        %v1297 = vpack.c.b16 %v1275, %v1274
        %v1298 = vpack.c.b16 %v1277, %v1276
        %v1299 = vpack.c.b16 %v1279, %v1278
        %v1300 = vpack.c.b16 %v1281, %v1280
        %v1301 = vpack.c.b16 %v1283, %v1282
        %v1302 = vpack.c.b16 %v1285, %v1284
        %v1303 = vpack.c.b16 %v1287, %v1286
        %1320 = vmatpush.bf16.msra.mxu0 %v1295
        %1321 = vmatpush.bf16.msra.mxu0 %v1294
        %1322 = vmatpush.bf16.msra.mxu0 %v1293
        %1323 = vmatpush.bf16.msra.mxu0 %v1292
        %1324 = vmatpush.bf16.msra.mxu0 %v1291
        %1325 = vmatpush.bf16.msra.mxu0 %v1290
        %1326 = vmatpush.bf16.msra.mxu0 %v1289
        %1327 = vmatpush.bf16.msra.mxu0 %v1288
        %1328 = vmatmul.bf16.gmra.mxu0 %v1176
        %v1329 = vpop.f32.mrf.mxu0
        %v1330 = vadd.f32 0.0, %v1329
        %v1331 = vpop.f32.mrf.mxu0
        %v1332 = vadd.f32 0.0, %v1331
        %1333 = vmatmul.bf16.gmra.mxu0 %v1178
        %v1334 = vpop.f32.mrf.mxu0
        %v1335 = vadd.f32 0.0, %v1334
        %v1336 = vpop.f32.mrf.mxu0
        %v1337 = vadd.f32 0.0, %v1336
        %1338 = vmatmul.bf16.gmra.mxu0 %v1180
        %v1339 = vpop.f32.mrf.mxu0
        %v1340 = vadd.f32 0.0, %v1339
        %v1341 = vpop.f32.mrf.mxu0
        %v1342 = vadd.f32 0.0, %v1341
        %1343 = vmatmul.bf16.gmra.mxu0 %v1182
        %v1344 = vpop.f32.mrf.mxu0
        %v1345 = vadd.f32 0.0, %v1344
        %v1346 = vpop.f32.mrf.mxu0
        %v1347 = vadd.f32 0.0, %v1346
        %1348 = vmatmul.bf16.gmra.mxu0 %v1184
        %v1349 = vpop.f32.mrf.mxu0
        %v1350 = vadd.f32 0.0, %v1349
        %v1351 = vpop.f32.mrf.mxu0
        %v1352 = vadd.f32 0.0, %v1351
        %1353 = vmatmul.bf16.gmra.mxu0 %v1186
        %v1354 = vpop.f32.mrf.mxu0
        %v1355 = vadd.f32 0.0, %v1354
        %v1356 = vpop.f32.mrf.mxu0
        %v1357 = vadd.f32 0.0, %v1356
        %1358 = vmatmul.bf16.gmra.mxu0 %v1188
        %v1359 = vpop.f32.mrf.mxu0
        %v1360 = vadd.f32 0.0, %v1359
        %v1361 = vpop.f32.mrf.mxu0
        %v1362 = vadd.f32 0.0, %v1361
        %1363 = vmatmul.bf16.gmra.mxu0 %v1190
        %v1364 = vpop.f32.mrf.mxu0
        %v1365 = vadd.f32 0.0, %v1364
        %v1366 = vpop.f32.mrf.mxu0
        %v1367 = vadd.f32 0.0, %v1366
        %1368 = vdwg.mxu0
        %1369 = vmatpush.bf16.msra.mxu0 %v1303
        %1370 = vmatpush.bf16.msra.mxu0 %v1302
        %1371 = vmatpush.bf16.msra.mxu0 %v1301
        %1372 = vmatpush.bf16.msra.mxu0 %v1300
        %1373 = vmatpush.bf16.msra.mxu0 %v1299
        %1374 = vmatpush.bf16.msra.mxu0 %v1298
        %1375 = vmatpush.bf16.msra.mxu0 %v1297
        %1376 = vmatpush.bf16.msra.mxu0 %v1296
        %1377 = vmatmul.bf16.gmra.mxu0 %v1177
        %v1378 = vpop.f32.mrf.mxu0
        %v1379 = vadd.f32 %v1330, %v1378
        %v1380 = vpop.f32.mrf.mxu0
        %v1381 = vadd.f32 %v1332, %v1380
        %1382 = vmatmul.bf16.gmra.mxu0 %v1179
        %v1383 = vpop.f32.mrf.mxu0
        %v1384 = vadd.f32 %v1335, %v1383
        %v1385 = vpop.f32.mrf.mxu0
        %v1386 = vadd.f32 %v1337, %v1385
        %1387 = vmatmul.bf16.gmra.mxu0 %v1181
        %v1388 = vpop.f32.mrf.mxu0
        %v1389 = vadd.f32 %v1340, %v1388
        %v1390 = vpop.f32.mrf.mxu0
        %v1391 = vadd.f32 %v1342, %v1390
        %1392 = vmatmul.bf16.gmra.mxu0 %v1183
        %v1393 = vpop.f32.mrf.mxu0
        %v1394 = vadd.f32 %v1345, %v1393
        %v1395 = vpop.f32.mrf.mxu0
        %v1396 = vadd.f32 %v1347, %v1395
        %1397 = vmatmul.bf16.gmra.mxu0 %v1185
        %v1398 = vpop.f32.mrf.mxu0
        %v1399 = vadd.f32 %v1350, %v1398
        %v1400 = vpop.f32.mrf.mxu0
        %v1401 = vadd.f32 %v1352, %v1400
        %1402 = vmatmul.bf16.gmra.mxu0 %v1187
        %v1403 = vpop.f32.mrf.mxu0
        %v1404 = vadd.f32 %v1355, %v1403
        %v1405 = vpop.f32.mrf.mxu0
        %v1406 = vadd.f32 %v1357, %v1405
        %1407 = vmatmul.bf16.gmra.mxu0 %v1189
        %v1408 = vpop.f32.mrf.mxu0
        %v1409 = vadd.f32 %v1360, %v1408
        %v1410 = vpop.f32.mrf.mxu0
        %v1411 = vadd.f32 %v1362, %v1410
        %1412 = vmatmul.bf16.gmra.mxu0 %v1191
        %v1413 = vpop.f32.mrf.mxu0
        %v1414 = vadd.f32 %v1365, %v1413
        %v1415 = vpop.f32.mrf.mxu0
        %v1416 = vadd.f32 %v1367, %v1415
        %1417 = vdwg.mxu0
        %v1418 = vadd.f32 %v1160, %v1379
        %v1419 = vadd.f32 %v1161, %v1381
        %v1420 = vadd.f32 %v1162, %v1384
        %v1421 = vadd.f32 %v1163, %v1386
        %v1422 = vadd.f32 %v1164, %v1389
        %v1423 = vadd.f32 %v1165, %v1391
        %v1424 = vadd.f32 %v1166, %v1394
        %v1425 = vadd.f32 %v1167, %v1396
        %v1426 = vadd.f32 %v1168, %v1399
        %v1427 = vadd.f32 %v1169, %v1401
        %v1428 = vadd.f32 %v1170, %v1404
        %v1429 = vadd.f32 %v1171, %v1406
        %v1430 = vadd.f32 %v1172, %v1409
        %v1431 = vadd.f32 %v1173, %v1411
        %v1432 = vadd.f32 %v1174, %v1414
        %v1433 = vadd.f32 %v1175, %v1416
        %1434 = vst [vmem:[#allocation3] sm:$0xff] %v1418
        %1435 = vst [vmem:[#allocation3 + $0x8] sm:$0xff] %v1419
        %1436 = vst [vmem:[#allocation3 + $0x10] sm:$0xff] %v1420
        %1437 = vst [vmem:[#allocation3 + $0x18] sm:$0xff] %v1421
        %1438 = vst [vmem:[#allocation3 + $0x20] sm:$0xff] %v1422
        %1439 = vst [vmem:[#allocation3 + $0x28] sm:$0xff] %v1423
        %1440 = vst [vmem:[#allocation3 + $0x30] sm:$0xff] %v1424
        %1441 = vst [vmem:[#allocation3 + $0x38] sm:$0xff] %v1425
        %1442 = vst [vmem:[#allocation3 + $0x40] sm:$0xff] %v1426
        %1443 = vst [vmem:[#allocation3 + $0x48] sm:$0xff] %v1427
        %1444 = vst [vmem:[#allocation3 + $0x50] sm:$0xff] %v1428
        %1445 = vst [vmem:[#allocation3 + $0x58] sm:$0xff] %v1429
        %1446 = vst [vmem:[#allocation3 + $0x60] sm:$0xff] %v1430
        %1447 = vst [vmem:[#allocation3 + $0x68] sm:$0xff] %v1431
        %1448 = vst [vmem:[#allocation3 + $0x70] sm:$0xff] %v1432
        %1449 = vst [vmem:[#allocation3 + $0x78] sm:$0xff] %v1433
        // Predicated region
        $region65: #{tpu_custom_call.1} parent=47 // pred_check
          %p1450 = pneg %p385
        $region66: #{tpu_custom_call.1} parent=47 // pred_check_branch
          %1452 = sbr.rel (%p1450) target = $region68
        $region67: #{tpu_custom_call.1} parent=47 // pred_region
          %v1453 = vld [vmem:[%s330] sm:$0xff]
          %v1454 = vld [vmem:[%s330 + $0x8] sm:$0xff]
          %v1455 = vld [vmem:[%s330 + $0x10] sm:$0xff]
          %v1456 = vld [vmem:[%s330 + $0x18] sm:$0xff]
          %v1457 = vld [vmem:[%s330 + $0x20] sm:$0xff]
          %v1458 = vld [vmem:[%s330 + $0x28] sm:$0xff]
          %v1459 = vld [vmem:[%s330 + $0x30] sm:$0xff]
          %v1460 = vld [vmem:[%s330 + $0x38] sm:$0xff]
          %v1461 = vld [vmem:[%s330 + $0x40] sm:$0xff]
          %v1462 = vld [vmem:[%s330 + $0x48] sm:$0xff]
          %v1463 = vld [vmem:[%s330 + $0x50] sm:$0xff]
          %v1464 = vld [vmem:[%s330 + $0x58] sm:$0xff]
          %v1465 = vld [vmem:[%s330 + $0x60] sm:$0xff]
          %v1466 = vld [vmem:[%s330 + $0x68] sm:$0xff]
          %v1467 = vld [vmem:[%s330 + $0x70] sm:$0xff]
          %v1468 = vld [vmem:[%s330 + $0x78] sm:$0xff]
          %v1469 = vld [vmem:[#allocation3] sm:$0xff]
          %v1470 = vld [vmem:[#allocation3 + $0x8] sm:$0xff]
          %v1471 = vld [vmem:[#allocation3 + $0x10] sm:$0xff]
          %v1472 = vld [vmem:[#allocation3 + $0x18] sm:$0xff]
          %v1473 = vld [vmem:[#allocation3 + $0x20] sm:$0xff]
          %v1474 = vld [vmem:[#allocation3 + $0x28] sm:$0xff]
          %v1475 = vld [vmem:[#allocation3 + $0x30] sm:$0xff]
          %v1476 = vld [vmem:[#allocation3 + $0x38] sm:$0xff]
          %v1477 = vld [vmem:[#allocation3 + $0x40] sm:$0xff]
          %v1478 = vld [vmem:[#allocation3 + $0x48] sm:$0xff]
          %v1479 = vld [vmem:[#allocation3 + $0x50] sm:$0xff]
          %v1480 = vld [vmem:[#allocation3 + $0x58] sm:$0xff]
          %v1481 = vld [vmem:[#allocation3 + $0x60] sm:$0xff]
          %v1482 = vld [vmem:[#allocation3 + $0x68] sm:$0xff]
          %v1483 = vld [vmem:[#allocation3 + $0x70] sm:$0xff]
          %v1484 = vld [vmem:[#allocation3 + $0x78] sm:$0xff]
          %v1485 = vadd.f32 %v1453, %v1469
          %v1486 = vadd.f32 %v1454, %v1470
          %v1487 = vadd.f32 %v1455, %v1471
          %v1488 = vadd.f32 %v1456, %v1472
          %v1489 = vadd.f32 %v1457, %v1473
          %v1490 = vadd.f32 %v1458, %v1474
          %v1491 = vadd.f32 %v1459, %v1475
          %v1492 = vadd.f32 %v1460, %v1476
          %v1493 = vadd.f32 %v1461, %v1477
          %v1494 = vadd.f32 %v1462, %v1478
          %v1495 = vadd.f32 %v1463, %v1479
          %v1496 = vadd.f32 %v1464, %v1480
          %v1497 = vadd.f32 %v1465, %v1481
          %v1498 = vadd.f32 %v1466, %v1482
          %v1499 = vadd.f32 %v1467, %v1483
          %v1500 = vadd.f32 %v1468, %v1484
          %v1501 = vld [vmem:[%s6] sm:$0x1]
          %v1503 = vperm.slane %v1501, 0
          %v1505 = vadd.f32 %v1485, %v1503
          %v1506 = vadd.f32 %v1486, %v1503
          %v1507 = vadd.f32 %v1487, %v1503
          %v1508 = vadd.f32 %v1488, %v1503
          %v1509 = vadd.f32 %v1489, %v1503
          %v1510 = vadd.f32 %v1490, %v1503
          %v1511 = vadd.f32 %v1491, %v1503
          %v1512 = vadd.f32 %v1492, %v1503
          %v1513 = vadd.f32 %v1493, %v1503
          %v1514 = vadd.f32 %v1494, %v1503
          %v1515 = vadd.f32 %v1495, %v1503
          %v1516 = vadd.f32 %v1496, %v1503
          %v1517 = vadd.f32 %v1497, %v1503
          %v1518 = vadd.f32 %v1498, %v1503
          %v1519 = vadd.f32 %v1499, %v1503
          %v1520 = vadd.f32 %v1500, %v1503
          %1521 = vst [vmem:[%s375] sm:$0xff] %v1505
          %1522 = vst [vmem:[%s375 + $0x8] sm:$0xff] %v1506
          %1523 = vst [vmem:[%s375 + $0x10] sm:$0xff] %v1507
          %1524 = vst [vmem:[%s375 + $0x18] sm:$0xff] %v1508
          %1525 = vst [vmem:[%s375 + $0x20] sm:$0xff] %v1509
          %1526 = vst [vmem:[%s375 + $0x28] sm:$0xff] %v1510
          %1527 = vst [vmem:[%s375 + $0x30] sm:$0xff] %v1511
          %1528 = vst [vmem:[%s375 + $0x38] sm:$0xff] %v1512
          %1529 = vst [vmem:[%s375 + $0x40] sm:$0xff] %v1513
          %1530 = vst [vmem:[%s375 + $0x48] sm:$0xff] %v1514
          %1531 = vst [vmem:[%s375 + $0x50] sm:$0xff] %v1515
          %1532 = vst [vmem:[%s375 + $0x58] sm:$0xff] %v1516
          %1533 = vst [vmem:[%s375 + $0x60] sm:$0xff] %v1517
          %1534 = vst [vmem:[%s375 + $0x68] sm:$0xff] %v1518
          %1535 = vst [vmem:[%s375 + $0x70] sm:$0xff] %v1519
          %1536 = vst [vmem:[%s375 + $0x78] sm:$0xff] %v1520
        $region68: #{tpu_custom_call.1} parent=47 // pred_fallthru
          _
        %s1537 = sand.u32 %s214, 1
        %s1538 = scalar_lea.sflag [#allocation8], %s1537
        %s1539 = sand.u32 %s214, 1
        %s1540 = smul.addr %s1539, 128
        %s1541 = scalar_lea.vmem [#allocation12], %s1540
        // Predicated region
        $region69: #{tpu_custom_call.1} parent=47 // pred_check
          %p1542 = pneg %p224
        $region70: #{tpu_custom_call.1} parent=47 // pred_check_branch
          %1544 = sbr.rel (%p1542) target = $region72
        $region71: #{tpu_custom_call.1} parent=47 // pred_region
          %s1545 = smul.u32 16, %s31
          %1547 = vsyncadd %s1538, 0
          %s1548 = smul.addr %s1545, 8
          %s1549 = scalar_lea.hbm %s7, %s1548
          %s1550 = sshll.u32 %s1541, 4
          %s1551 = int_to_ptr.vmem [resolvable:$true] %s1550
          %s1552 = sshll.u32 %s1549, 4
          %s1553 = int_to_ptr.hbm [resolvable:$true] %s1552
          %1558 = dma.vmem_to_hbm [thread:$0]  %s1551, 2048, %s1553, %s1538, 128, 128, 8
        $region72: #{tpu_custom_call.1} parent=47 // pred_fallthru
          _
      $region48: #{tpu_custom_call.1} parent=5 // pred_fallthru
        _
      %p1559 = scmp.le.s32.totalorder 2, %s22
      // Predicated region
      $region73: #{tpu_custom_call.1} parent=5 // pred_check
        %p1560 = pneg %p1559
      $region74: #{tpu_custom_call.1} parent=5 // pred_check_branch
        %1562 = sbr.rel (%p1560) target = $region76
      $region75: #{tpu_custom_call.1} parent=5 // pred_region
        %s1563 = ssub.s32 %s22, 2
        // Predicated region
        $region77: #{tpu_custom_call.1} parent=75 // pred_check
          %p1564 = pneg %p230
        $region78: #{tpu_custom_call.1} parent=75 // pred_check_branch
          %1566 = sbr.rel (%p1564) target = $region80
        $region79: #{tpu_custom_call.1} parent=75 // pred_region
          %s1567 = sand.u32 %s215, 1
          %s1568 = scalar_lea.sflag [#allocation8], %s1567
          %s1569 = sand.u32 %s215, 1
          %s1570 = smul.addr %s1569, 128
          %s1571 = scalar_lea.vmem [#allocation12], %s1570
          %1573 = dma.done %s1568, 2048
        $region80: #{tpu_custom_call.1} parent=75 // pred_fallthru
          _
      $region76: #{tpu_custom_call.1} parent=5 // pred_fallthru
        _
    $region6: #{tpu_custom_call.1} parent=1 // loop_footer
      %s26 = sadd.s32 1, %s22
    $region7: #{tpu_custom_call.1} parent=1 // loop_footer_branch
      %21 = sbr.rel target = $region3
    $region8: #{tpu_custom_call.1} parent=1 // loop_exit
      _
    %1574 = vsyncpa [#allocation7], 1
    %s1575 = scalar_lea.sflag [#allocation7], 1
    %1576 = vsyncpa %s1575, 1
    %1577 = vsyncpa [#allocation10], 1
    %1578 = vsyncpa [#allocation8], 1
    %s1579 = scalar_lea.sflag [#allocation8], 1
    %1580 = vsyncpa %s1579, 1

</llo_original>
